<compile_context>
chip_gen: v6e
topology: v6e:2x2x1
jax: 0.10.0
libtpu: 0.0.40
codegen_flags: <defaults>
</compile_context>

<pallas_src>
import jax
import jax.numpy as jnp
from jax import lax
from jax.experimental import pallas as pl
from jax.experimental.pallas import tpu as pltpu


def _round_up(n, m):
    return ((n + m - 1) // m) * m


def simple_lstm_forward(x_btI, w_ih, w_hh, b_ih, b_hh, fc_w, fc_b,
                        recurrent_dtype=jnp.bfloat16):
    """x_btI: (B, T, I) float32. Returns (B, T, C), matching the PyTorch module.

    recurrent_dtype: dtype of the h @ W_hh^T MXU operands (bf16 default;
    pass jnp.float32 for bit-tight validation). Accumulation is always fp32.
    """
    B, T, I = x_btI.shape
    H4 = w_ih.shape[0]
    H = H4 // 4
    C = fc_w.shape[0]

    HP = _round_up(H, 128)      # padded hidden  -> each gate block = whole vregs
    CP = _round_up(C, 128)      # padded classes -> lane-dense output store
    BP = _round_up(B, 8)        # padded batch   -> full sublane tile per step
    TBP = T * BP

    # Gate reorder: PyTorch (i, f, g, o) -> (i, f, o, g) so one sigmoid covers
    # a contiguous 3*HP slice and tanh covers the last HP slice.
    perm = jnp.array([0, 1, 3, 2])

    # ---- wrapper glue: time-major flatten, batch padded to BP rows per step
    x_tb = jnp.transpose(x_btI, (1, 0, 2))                      # (T, B, I)
    x_tb = jnp.pad(x_tb, ((0, 0), (0, BP - B), (0, 0)))         # (T, BP, I)
    x_flat = x_tb.reshape(TBP, I)                               # row = t*BP + b

    # (4H, I)^T -> (I, 4, H) -> gate reorder -> pad H->HP -> (I, 4*HP)
    w_ih_p = jnp.pad(w_ih.T.reshape(I, 4, H)[:, perm, :],
                     ((0, 0), (0, 0), (0, HP - H))).reshape(I, 4 * HP)
    # (4H, H)^T -> (H, 4, H) -> gate reorder -> pad rows/width -> (HP, 4*HP)
    w_hh_p = jnp.pad(w_hh.T.reshape(H, 4, H)[:, perm, :],
                     ((0, HP - H), (0, 0), (0, HP - H))).reshape(HP, 4 * HP)
    w_hh_p = w_hh_p.astype(recurrent_dtype)
    b_p = jnp.pad((b_ih + b_hh).reshape(4, H)[perm, :],
                  ((0, 0), (0, HP - H))).reshape(1, 4 * HP)
    fc_w_p = jnp.pad(fc_w.T, ((0, HP - H), (0, CP - C)))        # (HP, CP)
    fc_b_p = jnp.pad(fc_b, (0, CP - C)).reshape(1, CP)          # (1, CP)

    def kernel(x_ref, w_ih_ref, w_hh_ref, b_ref, fc_w_ref, fc_b_ref,
               out_ref, xw_scr):
        # Phase 1 (parallel, off the serial chain): input projection for all
        # timesteps in one matmul; park the result in VMEM scratch so the
        # unrolled loop does one tile-aligned load per step.
        xw_scr[...] = (jnp.dot(x_ref[...], w_ih_ref[...],
                               preferred_element_type=jnp.float32)
                       + b_ref[...])                            # (T*BP, 4*HP)

        w_hh_v = w_hh_ref[...]                                  # loop-invariant

        # Phase 2 (serial): T-step recurrence; h/c carried in registers,
        # every slice / add is full (8, 128k) vreg tiles.
        h = jnp.zeros((BP, HP), jnp.float32)
        c = jnp.zeros((BP, HP), jnp.float32)
        h_hist = []
        for t in range(T):                      # static T -> fully unrolled
            gates = xw_scr[pl.ds(t * BP, BP), :] + jnp.dot(
                h.astype(w_hh_v.dtype), w_hh_v,
                preferred_element_type=jnp.float32)             # (BP, 4*HP)
            sig = jax.nn.sigmoid(gates[:, :3 * HP])             # i | f | o
            i_g = sig[:, 0 * HP:1 * HP]
            f_g = sig[:, 1 * HP:2 * HP]
            o_g = sig[:, 2 * HP:3 * HP]
            g_g = jnp.tanh(gates[:, 3 * HP:4 * HP])
            c = f_g * c + i_g * g_g
            h = o_g * jnp.tanh(c)
            h_hist.append(h)                    # stays live (8 KiB/step total)

        # Phase 3 (parallel): one batched FC head + single lane-dense store.
        hs = jnp.concatenate(h_hist, axis=0)                    # (T*BP, HP)
        out_ref[...] = (jnp.dot(hs, fc_w_ref[...],
                                preferred_element_type=jnp.float32)
                        + fc_b_ref[...]).astype(out_ref.dtype)

    vmem = pltpu.MemorySpace.VMEM
    out_flat = pl.pallas_call(
        kernel,
        out_shape=jax.ShapeDtypeStruct((TBP, CP), jnp.float32),
        in_specs=[pl.BlockSpec(memory_space=vmem) for _ in range(6)],
        out_specs=pl.BlockSpec(memory_space=vmem),
        scratch_shapes=[pltpu.VMEM((TBP, 4 * HP), jnp.float32)],
    )(x_flat, w_ih_p, w_hh_p, b_p, fc_w_p, fc_b_p)

    out = out_flat.reshape(T, BP, CP)[:, :B, :C]    # strip batch/class padding
    return jnp.transpose(out, (1, 0, 2))            # (B, T, C)


def simple_lstm_ref(x_btI, w_ih, w_hh, b_ih, b_hh, fc_w, fc_b):
    """Pure-JAX reference (lax.scan) mirroring torch.nn.LSTM + Linear."""
    B, T, I = x_btI.shape
    H = w_hh.shape[1]

    def step(carry, x_t):
        h, c = carry
        gates = x_t @ w_ih.T + b_ih + h @ w_hh.T + b_hh
        i_g = jax.nn.sigmoid(gates[:, 0 * H:1 * H])
        f_g = jax.nn.sigmoid(gates[:, 1 * H:2 * H])
        g_g = jnp.tanh(gates[:, 2 * H:3 * H])
        o_g = jax.nn.sigmoid(gates[:, 3 * H:4 * H])
        c_new = f_g * c + i_g * g_g
        h_new = o_g * jnp.tanh(c_new)
        return (h_new, c_new), h_new

    h0 = jnp.zeros((B, H), jnp.float32)
    c0 = jnp.zeros((B, H), jnp.float32)
    _, hs = lax.scan(step, (h0, c0), jnp.transpose(x_btI, (1, 0, 2)))  # (T,B,H)
    out = hs @ fc_w.T + fc_b                                           # (T,B,C)
    return jnp.transpose(out, (1, 0, 2))                               # (B,T,C)


if __name__ == "__main__":
    # module hyper-params (from the PyTorch source)
    input_size = 5
    hidden_size = 64
    num_classes = 5
    num_layers = 1  # kernel implements the single-layer case used by the module

    # small deterministic shapes
    B, T = 2, 8

    key = jax.random.PRNGKey(0)
    k = jax.random.split(key, 8)
    bound = 1.0 / jnp.sqrt(hidden_size)

    # PyTorch LSTM / Linear parameter shapes, uniform(-1/sqrt(H), 1/sqrt(H)) init
    w_ih = jax.random.uniform(k[0], (4 * hidden_size, input_size),
                              jnp.float32, -bound, bound)
    w_hh = jax.random.uniform(k[1], (4 * hidden_size, hidden_size),
                              jnp.float32, -bound, bound)
    b_ih = jax.random.uniform(k[2], (4 * hidden_size,), jnp.float32, -bound, bound)
    b_hh = jax.random.uniform(k[3], (4 * hidden_size,), jnp.float32, -bound, bound)
    fc_w = jax.random.uniform(k[4], (num_classes, hidden_size),
                              jnp.float32, -bound, bound)
    fc_b = jax.random.uniform(k[5], (num_classes,), jnp.float32, -bound, bound)

    x = jax.random.normal(k[6], (B, T, input_size), jnp.float32)

    ref = jax.block_until_ready(
        simple_lstm_ref(x, w_ih, w_hh, b_ih, b_hh, fc_w, fc_b))

    # fp32 recurrent path: tight check against the reference.
    out_f32 = jax.block_until_ready(
        simple_lstm_forward(x, w_ih, w_hh, b_ih, b_hh, fc_w, fc_b,
                            recurrent_dtype=jnp.float32))
    assert out_f32.shape == (B, T, num_classes), out_f32.shape
    assert jnp.allclose(out_f32, ref, atol=1e-5, rtol=1e-5), \
        float(jnp.max(jnp.abs(out_f32 - ref)))

    # bf16 recurrent path (default / perf config): looser tolerance.
    out_bf16 = jax.block_until_ready(
        simple_lstm_forward(x, w_ih, w_hh, b_ih, b_hh, fc_w, fc_b,
                            recurrent_dtype=jnp.bfloat16))
    assert out_bf16.shape == (B, T, num_classes), out_bf16.shape
    assert jnp.allclose(out_bf16, ref, atol=1e-2, rtol=1e-2), \
        float(jnp.max(jnp.abs(out_bf16 - ref)))

    print("KERNEL_OK")
</pallas_src>

<mosaic_0001>
module attributes {stable_mosaic.version = 11 : i64} {
  func.func @kernel(%arg0: memref<64x5xf32, #tpu.memory_space<vmem>>, %arg1: memref<5x512xf32, #tpu.memory_space<vmem>>, %arg2: memref<128x512xf32, #tpu.memory_space<vmem>>, %arg3: memref<1x512xf32, #tpu.memory_space<vmem>>, %arg4: memref<128x128xf32, #tpu.memory_space<vmem>>, %arg5: memref<1x128xf32, #tpu.memory_space<vmem>>, %arg6: memref<64x128xf32, #tpu.memory_space<vmem>>, %arg7: memref<64x512xf32, #tpu.memory_space<vmem>>) attributes {dimension_semantics = [], scalar_prefetch = 0 : i64, scratch_operands = 1 : i64, tpu.core_type = #tpu.core_type<tc>} {
    %c0 = arith.constant 0 : index
    %c0_0 = arith.constant 0 : index
    %0 = vector.load %arg0[%c0, %c0_0] : memref<64x5xf32, #tpu.memory_space<vmem>>, vector<64x5xf32>
    %c0_1 = arith.constant 0 : index
    %c0_2 = arith.constant 0 : index
    %1 = vector.load %arg1[%c0_1, %c0_2] : memref<5x512xf32, #tpu.memory_space<vmem>>, vector<5x512xf32>
    %cst = arith.constant dense<0.000000e+00> : vector<64x512xf32>
    %2 = tpu.matmul %0, %1, %cst {dimension_numbers = #tpu.dot_dimension_numbers<[1], [0], [0], [1], [0, 0, 1, 1], [], []>} : vector<64x5xf32>, vector<5x512xf32>, vector<64x512xf32> -> vector<64x512xf32>
    %c0_3 = arith.constant 0 : index
    %c0_4 = arith.constant 0 : index
    %3 = vector.load %arg3[%c0_3, %c0_4] : memref<1x512xf32, #tpu.memory_space<vmem>>, vector<1x512xf32>
    %4 = vector.broadcast %3 : vector<1x512xf32> to vector<64x512xf32>
    %5 = arith.addf %2, %4 : vector<64x512xf32>
    %c0_5 = arith.constant 0 : index
    %c0_6 = arith.constant 0 : index
    %6 = vector.load %arg7[%c0_5, %c0_6] : memref<64x512xf32, #tpu.memory_space<vmem>>, vector<64x512xf32>
    tpu.vector_store %arg7[%c0_5, %c0_6], %5 {strides = array<i32>} : memref<64x512xf32, #tpu.memory_space<vmem>>, vector<64x512xf32>,
    %c0_7 = arith.constant 0 : index
    %c0_8 = arith.constant 0 : index
    %7 = vector.load %arg2[%c0_7, %c0_8] : memref<128x512xf32, #tpu.memory_space<vmem>>, vector<128x512xf32>
    %cst_9 = arith.constant 0.000000e+00 : f32
    %8 = vector.broadcast %cst_9 : f32 to vector<8x128xf32>
    %cst_10 = arith.constant 0.000000e+00 : f32
    %9 = vector.broadcast %cst_10 : f32 to vector<8x128xf32>
    %c0_11 = arith.constant 0 : index
    %c0_12 = arith.constant 0 : index
    %10 = vector.load %arg7[%c0_11, %c0_12] : memref<64x512xf32, #tpu.memory_space<vmem>>, vector<8x512xf32>
    %cst_13 = arith.constant dense<0.000000e+00> : vector<8x512xf32>
    %11 = tpu.matmul %8, %7, %cst_13 {dimension_numbers = #tpu.dot_dimension_numbers<[1], [0], [0], [1], [0, 0, 1, 1], [], []>} : vector<8x128xf32>, vector<128x512xf32>, vector<8x512xf32> -> vector<8x512xf32>
    %12 = arith.addf %10, %11 : vector<8x512xf32>
    %13 = vector.extract_strided_slice %12 {offsets = [0, 0], sizes = [8, 384], strides = [1, 1]} : vector<8x512xf32> to vector<8x384xf32>
    %14 = arith.negf %13 : vector<8x384xf32>
    %15 = math.exp %14 : vector<8x384xf32>
    %cst_14 = arith.constant 1.000000e+00 : f32
    %16 = vector.broadcast %cst_14 : f32 to vector<8x384xf32>
    %17 = arith.addf %16, %15 : vector<8x384xf32>
    %18 = arith.divf %16, %17 : vector<8x384xf32>
    %19 = vector.extract_strided_slice %18 {offsets = [0, 0], sizes = [8, 128], strides = [1, 1]} : vector<8x384xf32> to vector<8x128xf32>
    %20 = vector.extract_strided_slice %18 {offsets = [0, 128], sizes = [8, 128], strides = [1, 1]} : vector<8x384xf32> to vector<8x128xf32>
    %21 = vector.extract_strided_slice %18 {offsets = [0, 256], sizes = [8, 128], strides = [1, 1]} : vector<8x384xf32> to vector<8x128xf32>
    %22 = vector.extract_strided_slice %12 {offsets = [0, 384], sizes = [8, 128], strides = [1, 1]} : vector<8x512xf32> to vector<8x128xf32>
    %23 = math.tanh %22 : vector<8x128xf32>
    %24 = arith.mulf %20, %9 : vector<8x128xf32>
    %25 = arith.mulf %19, %23 : vector<8x128xf32>
    %26 = arith.addf %24, %25 : vector<8x128xf32>
    %27 = math.tanh %26 : vector<8x128xf32>
    %28 = arith.mulf %21, %27 : vector<8x128xf32>
    %c8 = arith.constant 8 : index
    %c0_15 = arith.constant 0 : index
    %29 = vector.load %arg7[%c8, %c0_15] : memref<64x512xf32, #tpu.memory_space<vmem>>, vector<8x512xf32>
    %cst_16 = arith.constant dense<0.000000e+00> : vector<8x512xf32>
    %30 = tpu.matmul %28, %7, %cst_16 {dimension_numbers = #tpu.dot_dimension_numbers<[1], [0], [0], [1], [0, 0, 1, 1], [], []>} : vector<8x128xf32>, vector<128x512xf32>, vector<8x512xf32> -> vector<8x512xf32>
    %31 = arith.addf %29, %30 : vector<8x512xf32>
    %32 = vector.extract_strided_slice %31 {offsets = [0, 0], sizes = [8, 384], strides = [1, 1]} : vector<8x512xf32> to vector<8x384xf32>
    %33 = arith.negf %32 : vector<8x384xf32>
    %34 = math.exp %33 : vector<8x384xf32>
    %cst_17 = arith.constant 1.000000e+00 : f32
    %35 = vector.broadcast %cst_17 : f32 to vector<8x384xf32>
    %36 = arith.addf %35, %34 : vector<8x384xf32>
    %37 = arith.divf %35, %36 : vector<8x384xf32>
    %38 = vector.extract_strided_slice %37 {offsets = [0, 0], sizes = [8, 128], strides = [1, 1]} : vector<8x384xf32> to vector<8x128xf32>
    %39 = vector.extract_strided_slice %37 {offsets = [0, 128], sizes = [8, 128], strides = [1, 1]} : vector<8x384xf32> to vector<8x128xf32>
    %40 = vector.extract_strided_slice %37 {offsets = [0, 256], sizes = [8, 128], strides = [1, 1]} : vector<8x384xf32> to vector<8x128xf32>
    %41 = vector.extract_strided_slice %31 {offsets = [0, 384], sizes = [8, 128], strides = [1, 1]} : vector<8x512xf32> to vector<8x128xf32>
    %42 = math.tanh %41 : vector<8x128xf32>
    %43 = arith.mulf %39, %26 : vector<8x128xf32>
    %44 = arith.mulf %38, %42 : vector<8x128xf32>
    %45 = arith.addf %43, %44 : vector<8x128xf32>
    %46 = math.tanh %45 : vector<8x128xf32>
    %47 = arith.mulf %40, %46 : vector<8x128xf32>
    %c16 = arith.constant 16 : index
    %c0_18 = arith.constant 0 : index
    %48 = vector.load %arg7[%c16, %c0_18] : memref<64x512xf32, #tpu.memory_space<vmem>>, vector<8x512xf32>
    %cst_19 = arith.constant dense<0.000000e+00> : vector<8x512xf32>
    %49 = tpu.matmul %47, %7, %cst_19 {dimension_numbers = #tpu.dot_dimension_numbers<[1], [0], [0], [1], [0, 0, 1, 1], [], []>} : vector<8x128xf32>, vector<128x512xf32>, vector<8x512xf32> -> vector<8x512xf32>
    %50 = arith.addf %48, %49 : vector<8x512xf32>
    %51 = vector.extract_strided_slice %50 {offsets = [0, 0], sizes = [8, 384], strides = [1, 1]} : vector<8x512xf32> to vector<8x384xf32>
    %52 = arith.negf %51 : vector<8x384xf32>
    %53 = math.exp %52 : vector<8x384xf32>
    %cst_20 = arith.constant 1.000000e+00 : f32
    %54 = vector.broadcast %cst_20 : f32 to vector<8x384xf32>
    %55 = arith.addf %54, %53 : vector<8x384xf32>
    %56 = arith.divf %54, %55 : vector<8x384xf32>
    %57 = vector.extract_strided_slice %56 {offsets = [0, 0], sizes = [8, 128], strides = [1, 1]} : vector<8x384xf32> to vector<8x128xf32>
    %58 = vector.extract_strided_slice %56 {offsets = [0, 128], sizes = [8, 128], strides = [1, 1]} : vector<8x384xf32> to vector<8x128xf32>
    %59 = vector.extract_strided_slice %56 {offsets = [0, 256], sizes = [8, 128], strides = [1, 1]} : vector<8x384xf32> to vector<8x128xf32>
    %60 = vector.extract_strided_slice %50 {offsets = [0, 384], sizes = [8, 128], strides = [1, 1]} : vector<8x512xf32> to vector<8x128xf32>
    %61 = math.tanh %60 : vector<8x128xf32>
    %62 = arith.mulf %58, %45 : vector<8x128xf32>
    %63 = arith.mulf %57, %61 : vector<8x128xf32>
    %64 = arith.addf %62, %63 : vector<8x128xf32>
    %65 = math.tanh %64 : vector<8x128xf32>
    %66 = arith.mulf %59, %65 : vector<8x128xf32>
    %c24 = arith.constant 24 : index
    %c0_21 = arith.constant 0 : index
    %67 = vector.load %arg7[%c24, %c0_21] : memref<64x512xf32, #tpu.memory_space<vmem>>, vector<8x512xf32>
    %cst_22 = arith.constant dense<0.000000e+00> : vector<8x512xf32>
    %68 = tpu.matmul %66, %7, %cst_22 {dimension_numbers = #tpu.dot_dimension_numbers<[1], [0], [0], [1], [0, 0, 1, 1], [], []>} : vector<8x128xf32>, vector<128x512xf32>, vector<8x512xf32> -> vector<8x512xf32>
    %69 = arith.addf %67, %68 : vector<8x512xf32>
    %70 = vector.extract_strided_slice %69 {offsets = [0, 0], sizes = [8, 384], strides = [1, 1]} : vector<8x512xf32> to vector<8x384xf32>
    %71 = arith.negf %70 : vector<8x384xf32>
    %72 = math.exp %71 : vector<8x384xf32>
    %cst_23 = arith.constant 1.000000e+00 : f32
    %73 = vector.broadcast %cst_23 : f32 to vector<8x384xf32>
    %74 = arith.addf %73, %72 : vector<8x384xf32>
    %75 = arith.divf %73, %74 : vector<8x384xf32>
    %76 = vector.extract_strided_slice %75 {offsets = [0, 0], sizes = [8, 128], strides = [1, 1]} : vector<8x384xf32> to vector<8x128xf32>
    %77 = vector.extract_strided_slice %75 {offsets = [0, 128], sizes = [8, 128], strides = [1, 1]} : vector<8x384xf32> to vector<8x128xf32>
    %78 = vector.extract_strided_slice %75 {offsets = [0, 256], sizes = [8, 128], strides = [1, 1]} : vector<8x384xf32> to vector<8x128xf32>
    %79 = vector.extract_strided_slice %69 {offsets = [0, 384], sizes = [8, 128], strides = [1, 1]} : vector<8x512xf32> to vector<8x128xf32>
    %80 = math.tanh %79 : vector<8x128xf32>
    %81 = arith.mulf %77, %64 : vector<8x128xf32>
    %82 = arith.mulf %76, %80 : vector<8x128xf32>
    %83 = arith.addf %81, %82 : vector<8x128xf32>
    %84 = math.tanh %83 : vector<8x128xf32>
    %85 = arith.mulf %78, %84 : vector<8x128xf32>
    %c32 = arith.constant 32 : index
    %c0_24 = arith.constant 0 : index
    %86 = vector.load %arg7[%c32, %c0_24] : memref<64x512xf32, #tpu.memory_space<vmem>>, vector<8x512xf32>
    %cst_25 = arith.constant dense<0.000000e+00> : vector<8x512xf32>
    %87 = tpu.matmul %85, %7, %cst_25 {dimension_numbers = #tpu.dot_dimension_numbers<[1], [0], [0], [1], [0, 0, 1, 1], [], []>} : vector<8x128xf32>, vector<128x512xf32>, vector<8x512xf32> -> vector<8x512xf32>
    %88 = arith.addf %86, %87 : vector<8x512xf32>
    %89 = vector.extract_strided_slice %88 {offsets = [0, 0], sizes = [8, 384], strides = [1, 1]} : vector<8x512xf32> to vector<8x384xf32>
    %90 = arith.negf %89 : vector<8x384xf32>
    %91 = math.exp %90 : vector<8x384xf32>
    %cst_26 = arith.constant 1.000000e+00 : f32
    %92 = vector.broadcast %cst_26 : f32 to vector<8x384xf32>
    %93 = arith.addf %92, %91 : vector<8x384xf32>
    %94 = arith.divf %92, %93 : vector<8x384xf32>
    %95 = vector.extract_strided_slice %94 {offsets = [0, 0], sizes = [8, 128], strides = [1, 1]} : vector<8x384xf32> to vector<8x128xf32>
    %96 = vector.extract_strided_slice %94 {offsets = [0, 128], sizes = [8, 128], strides = [1, 1]} : vector<8x384xf32> to vector<8x128xf32>
    %97 = vector.extract_strided_slice %94 {offsets = [0, 256], sizes = [8, 128], strides = [1, 1]} : vector<8x384xf32> to vector<8x128xf32>
    %98 = vector.extract_strided_slice %88 {offsets = [0, 384], sizes = [8, 128], strides = [1, 1]} : vector<8x512xf32> to vector<8x128xf32>
    %99 = math.tanh %98 : vector<8x128xf32>
    %100 = arith.mulf %96, %83 : vector<8x128xf32>
    %101 = arith.mulf %95, %99 : vector<8x128xf32>
    %102 = arith.addf %100, %101 : vector<8x128xf32>
    %103 = math.tanh %102 : vector<8x128xf32>
    %104 = arith.mulf %97, %103 : vector<8x128xf32>
    %c40 = arith.constant 40 : index
    %c0_27 = arith.constant 0 : index
    %105 = vector.load %arg7[%c40, %c0_27] : memref<64x512xf32, #tpu.memory_space<vmem>>, vector<8x512xf32>
    %cst_28 = arith.constant dense<0.000000e+00> : vector<8x512xf32>
    %106 = tpu.matmul %104, %7, %cst_28 {dimension_numbers = #tpu.dot_dimension_numbers<[1], [0], [0], [1], [0, 0, 1, 1], [], []>} : vector<8x128xf32>, vector<128x512xf32>, vector<8x512xf32> -> vector<8x512xf32>
    %107 = arith.addf %105, %106 : vector<8x512xf32>
    %108 = vector.extract_strided_slice %107 {offsets = [0, 0], sizes = [8, 384], strides = [1, 1]} : vector<8x512xf32> to vector<8x384xf32>
    %109 = arith.negf %108 : vector<8x384xf32>
    %110 = math.exp %109 : vector<8x384xf32>
    %cst_29 = arith.constant 1.000000e+00 : f32
    %111 = vector.broadcast %cst_29 : f32 to vector<8x384xf32>
    %112 = arith.addf %111, %110 : vector<8x384xf32>
    %113 = arith.divf %111, %112 : vector<8x384xf32>
    %114 = vector.extract_strided_slice %113 {offsets = [0, 0], sizes = [8, 128], strides = [1, 1]} : vector<8x384xf32> to vector<8x128xf32>
    %115 = vector.extract_strided_slice %113 {offsets = [0, 128], sizes = [8, 128], strides = [1, 1]} : vector<8x384xf32> to vector<8x128xf32>
    %116 = vector.extract_strided_slice %113 {offsets = [0, 256], sizes = [8, 128], strides = [1, 1]} : vector<8x384xf32> to vector<8x128xf32>
    %117 = vector.extract_strided_slice %107 {offsets = [0, 384], sizes = [8, 128], strides = [1, 1]} : vector<8x512xf32> to vector<8x128xf32>
    %118 = math.tanh %117 : vector<8x128xf32>
    %119 = arith.mulf %115, %102 : vector<8x128xf32>
    %120 = arith.mulf %114, %118 : vector<8x128xf32>
    %121 = arith.addf %119, %120 : vector<8x128xf32>
    %122 = math.tanh %121 : vector<8x128xf32>
    %123 = arith.mulf %116, %122 : vector<8x128xf32>
    %c48 = arith.constant 48 : index
    %c0_30 = arith.constant 0 : index
    %124 = vector.load %arg7[%c48, %c0_30] : memref<64x512xf32, #tpu.memory_space<vmem>>, vector<8x512xf32>
    %cst_31 = arith.constant dense<0.000000e+00> : vector<8x512xf32>
    %125 = tpu.matmul %123, %7, %cst_31 {dimension_numbers = #tpu.dot_dimension_numbers<[1], [0], [0], [1], [0, 0, 1, 1], [], []>} : vector<8x128xf32>, vector<128x512xf32>, vector<8x512xf32> -> vector<8x512xf32>
    %126 = arith.addf %124, %125 : vector<8x512xf32>
    %127 = vector.extract_strided_slice %126 {offsets = [0, 0], sizes = [8, 384], strides = [1, 1]} : vector<8x512xf32> to vector<8x384xf32>
    %128 = arith.negf %127 : vector<8x384xf32>
    %129 = math.exp %128 : vector<8x384xf32>
    %cst_32 = arith.constant 1.000000e+00 : f32
    %130 = vector.broadcast %cst_32 : f32 to vector<8x384xf32>
    %131 = arith.addf %130, %129 : vector<8x384xf32>
    %132 = arith.divf %130, %131 : vector<8x384xf32>
    %133 = vector.extract_strided_slice %132 {offsets = [0, 0], sizes = [8, 128], strides = [1, 1]} : vector<8x384xf32> to vector<8x128xf32>
    %134 = vector.extract_strided_slice %132 {offsets = [0, 128], sizes = [8, 128], strides = [1, 1]} : vector<8x384xf32> to vector<8x128xf32>
    %135 = vector.extract_strided_slice %132 {offsets = [0, 256], sizes = [8, 128], strides = [1, 1]} : vector<8x384xf32> to vector<8x128xf32>
    %136 = vector.extract_strided_slice %126 {offsets = [0, 384], sizes = [8, 128], strides = [1, 1]} : vector<8x512xf32> to vector<8x128xf32>
    %137 = math.tanh %136 : vector<8x128xf32>
    %138 = arith.mulf %134, %121 : vector<8x128xf32>
    %139 = arith.mulf %133, %137 : vector<8x128xf32>
    %140 = arith.addf %138, %139 : vector<8x128xf32>
    %141 = math.tanh %140 : vector<8x128xf32>
    %142 = arith.mulf %135, %141 : vector<8x128xf32>
    %c56 = arith.constant 56 : index
    %c0_33 = arith.constant 0 : index
    %143 = vector.load %arg7[%c56, %c0_33] : memref<64x512xf32, #tpu.memory_space<vmem>>, vector<8x512xf32>
    %cst_34 = arith.constant dense<0.000000e+00> : vector<8x512xf32>
    %144 = tpu.matmul %142, %7, %cst_34 {dimension_numbers = #tpu.dot_dimension_numbers<[1], [0], [0], [1], [0, 0, 1, 1], [], []>} : vector<8x128xf32>, vector<128x512xf32>, vector<8x512xf32> -> vector<8x512xf32>
    %145 = arith.addf %143, %144 : vector<8x512xf32>
    %146 = vector.extract_strided_slice %145 {offsets = [0, 0], sizes = [8, 384], strides = [1, 1]} : vector<8x512xf32> to vector<8x384xf32>
    %147 = arith.negf %146 : vector<8x384xf32>
    %148 = math.exp %147 : vector<8x384xf32>
    %cst_35 = arith.constant 1.000000e+00 : f32
    %149 = vector.broadcast %cst_35 : f32 to vector<8x384xf32>
    %150 = arith.addf %149, %148 : vector<8x384xf32>
    %151 = arith.divf %149, %150 : vector<8x384xf32>
    %152 = vector.extract_strided_slice %151 {offsets = [0, 0], sizes = [8, 128], strides = [1, 1]} : vector<8x384xf32> to vector<8x128xf32>
    %153 = vector.extract_strided_slice %151 {offsets = [0, 128], sizes = [8, 128], strides = [1, 1]} : vector<8x384xf32> to vector<8x128xf32>
    %154 = vector.extract_strided_slice %151 {offsets = [0, 256], sizes = [8, 128], strides = [1, 1]} : vector<8x384xf32> to vector<8x128xf32>
    %155 = vector.extract_strided_slice %145 {offsets = [0, 384], sizes = [8, 128], strides = [1, 1]} : vector<8x512xf32> to vector<8x128xf32>
    %156 = math.tanh %155 : vector<8x128xf32>
    %157 = arith.mulf %153, %140 : vector<8x128xf32>
    %158 = arith.mulf %152, %156 : vector<8x128xf32>
    %159 = arith.addf %157, %158 : vector<8x128xf32>
    %160 = math.tanh %159 : vector<8x128xf32>
    %161 = arith.mulf %154, %160 : vector<8x128xf32>
    %162 = tpu.concatenate %28, %47, %66, %85, %104, %123, %142, %161 in 0 : vector<8x128xf32>, vector<8x128xf32>, vector<8x128xf32>, vector<8x128xf32>, vector<8x128xf32>, vector<8x128xf32>, vector<8x128xf32>, vector<8x128xf32> -> vector<64x128xf32>
    %c0_36 = arith.constant 0 : index
    %c0_37 = arith.constant 0 : index
    %163 = vector.load %arg4[%c0_36, %c0_37] : memref<128x128xf32, #tpu.memory_space<vmem>>, vector<128x128xf32>
    %cst_38 = arith.constant dense<0.000000e+00> : vector<64x128xf32>
    %164 = tpu.matmul %162, %163, %cst_38 {dimension_numbers = #tpu.dot_dimension_numbers<[1], [0], [0], [1], [0, 0, 1, 1], [], []>} : vector<64x128xf32>, vector<128x128xf32>, vector<64x128xf32> -> vector<64x128xf32>
    %c0_39 = arith.constant 0 : index
    %c0_40 = arith.constant 0 : index
    %165 = vector.load %arg5[%c0_39, %c0_40] : memref<1x128xf32, #tpu.memory_space<vmem>>, vector<1x128xf32>
    %166 = vector.broadcast %165 : vector<1x128xf32> to vector<64x128xf32>
    %167 = arith.addf %164, %166 : vector<64x128xf32>
    %c0_41 = arith.constant 0 : index
    %c0_42 = arith.constant 0 : index
    %168 = vector.load %arg6[%c0_41, %c0_42] : memref<64x128xf32, #tpu.memory_space<vmem>>, vector<64x128xf32>
    tpu.vector_store %arg6[%c0_41, %c0_42], %167 {strides = array<i32>} : memref<64x128xf32, #tpu.memory_space<vmem>>, vector<64x128xf32>,
    return
  }
}

</mosaic_0001>

<llo_original>
// kernel: tpu_custom_call.1
$region0: #{tpu_custom_call.1}
  #allocation0 [shape = 'u32[]', space=smem, size = 0x4, offset = 0x4, fixed_abs, tag = 'smem constant byte address 0x4 - core index']
  #allocation1 [shape = 'u32[144,128]{1,0:T(1,128)}', space=vmem, size = 0x12000, scoped, tag = 'internal scratch']
  #allocation2 [shape = 'f32[64,512]{1,0:T(8,128)}', space=vmem, size = 0x20000, scoped, tag = 'scratch operand']
  %s0 = inlined_call_operand.vmem [shape: f32[64,5], index: 0, kind: input, shape index: {}]
  %s1 = inlined_call_operand.vmem [shape: f32[5,512], index: 1, kind: input, shape index: {}]
  %s2 = inlined_call_operand.hbm [shape: f32[128,512], index: 2, kind: input, shape index: {}]
  %s3 = inlined_call_operand.vmem [shape: f32[1,512], index: 3, kind: input, shape index: {}]
  %s4 = inlined_call_operand.hbm [shape: f32[128,128], index: 4, kind: input, shape index: {}]
  %s5 = inlined_call_operand.vmem [shape: f32[1,128], index: 5, kind: input, shape index: {}]
  %s6 = inlined_call_operand.hbm [shape: f32[64,128], index: 6, kind: output, shape index: {}]
  %s7 = sld [smem:[#allocation0]]
  $region42: #{tpu_custom_call.1} parent=0
    _
  %s9 = ssub.s32 1, %s7
  %s10 = scalar_select 0, %s9, %s7
  $region1: #{tpu_custom_call.1} parent=0
    #allocation3 [shape = 'u8[262144]{0}', space=vmem, size = 0x40000, scoped, tag = 'input window, operand 2, single buffered']
    #allocation4 [shape = 's32[1]{0}', space=sflag, size = 0x4, scoped, tag = 'scoped memory for tpu_custom_call.1']
    #allocation5 [shape = 's32[1]{0}', space=sflag, size = 0x4, scoped, tag = 'scoped memory for tpu_custom_call.1']
    #allocation6 [shape = 'u8[65536]{0}', space=vmem, size = 0x10000, scoped, tag = 'input window, operand 4, single buffered']
    #allocation7 [shape = 's32[1]{0}', space=sflag, size = 0x4, scoped, tag = 'scoped memory for tpu_custom_call.1']
    #allocation8 [shape = 'u8[32768]{0}', space=vmem, size = 0x8000, scoped, tag = 'output window, operand 0, single buffered']
    %11 = vsyncpa [#allocation4], 0
    %12 = vsyncpa [#allocation7], 0
    %13 = vsyncpa [#allocation5], 0
    // Predicated region
    $region2: #{tpu_custom_call.1} parent=1 // pred_check
      _
    $region3: #{tpu_custom_call.1} parent=1 // pred_check_branch
      %15 = sbr.rel (0) target = $region5
    $region4: #{tpu_custom_call.1} parent=1 // pred_region
      _
    $region5: #{tpu_custom_call.1} parent=1 // pred_fallthru
      _
    // Predicated region
    $region6: #{tpu_custom_call.1} parent=1 // pred_check
      _
    $region7: #{tpu_custom_call.1} parent=1 // pred_check_branch
      %17 = sbr.rel (0) target = $region9
    $region8: #{tpu_custom_call.1} parent=1 // pred_region
      _
    $region9: #{tpu_custom_call.1} parent=1 // pred_fallthru
      _
    // Predicated region
    $region10: #{tpu_custom_call.1} parent=1 // pred_check
      _
    $region11: #{tpu_custom_call.1} parent=1 // pred_check_branch
      %19 = sbr.rel (0) target = $region13
    $region12: #{tpu_custom_call.1} parent=1 // pred_region
      %s21 = ssub.s32 8192, 8192
      %22 = vsyncadd [#allocation4], %s21
      %s23 = sshll.u32 [#allocation3], 4
      %s24 = int_to_ptr.vmem [resolvable:$true] %s23
      %29 = dma.hbm_to_vmem [thread:$0]  %s2, 8192, %s24, [#allocation4], 512, 512, 32
    $region13: #{tpu_custom_call.1} parent=1 // pred_fallthru
      _
    // Predicated region
    $region14: #{tpu_custom_call.1} parent=1 // pred_check
      _
    $region15: #{tpu_custom_call.1} parent=1 // pred_check_branch
      %31 = sbr.rel (0) target = $region17
    $region16: #{tpu_custom_call.1} parent=1 // pred_region
      _
    $region17: #{tpu_custom_call.1} parent=1 // pred_fallthru
      _
    // Predicated region
    $region18: #{tpu_custom_call.1} parent=1 // pred_check
      _
    $region19: #{tpu_custom_call.1} parent=1 // pred_check_branch
      %33 = sbr.rel (0) target = $region21
    $region20: #{tpu_custom_call.1} parent=1 // pred_region
      %s35 = ssub.s32 2048, 2048
      %36 = vsyncadd [#allocation7], %s35
      %s37 = sshll.u32 [#allocation6], 4
      %s38 = int_to_ptr.vmem [resolvable:$true] %s37
      %43 = dma.hbm_to_vmem [thread:$0]  %s4, 2048, %s38, [#allocation7], 128, 128, 8
    $region21: #{tpu_custom_call.1} parent=1 // pred_fallthru
      _
    // Predicated region
    $region22: #{tpu_custom_call.1} parent=1 // pred_check
      _
    $region23: #{tpu_custom_call.1} parent=1 // pred_check_branch
      %45 = sbr.rel (0) target = $region25
    $region24: #{tpu_custom_call.1} parent=1 // pred_region
      _
    $region25: #{tpu_custom_call.1} parent=1 // pred_fallthru
      _
    // Predicated region
    $region26: #{tpu_custom_call.1} parent=1 // pred_check
      _
    $region27: #{tpu_custom_call.1} parent=1 // pred_check_branch
      %47 = sbr.rel (0) target = $region29
    $region28: #{tpu_custom_call.1} parent=1 // pred_region
      %48 = dma.done [#allocation4], 8192
    $region29: #{tpu_custom_call.1} parent=1 // pred_fallthru
      _
    // Predicated region
    $region30: #{tpu_custom_call.1} parent=1 // pred_check
      _
    $region31: #{tpu_custom_call.1} parent=1 // pred_check_branch
      %50 = sbr.rel (0) target = $region33
    $region32: #{tpu_custom_call.1} parent=1 // pred_region
      %51 = dma.done [#allocation7], 2048
    $region33: #{tpu_custom_call.1} parent=1 // pred_fallthru
      _
    %v52 = vld [vmem:[%s0] sm:$0xff]
    %v53 = vld [vmem:[%s0 + $0x8] sm:$0xff]
    %v54 = vld [vmem:[%s0 + $0x10] sm:$0xff]
    %v55 = vld [vmem:[%s0 + $0x18] sm:$0xff]
    %v56 = vld [vmem:[%s0 + $0x20] sm:$0xff]
    %v57 = vld [vmem:[%s0 + $0x28] sm:$0xff]
    %v58 = vld [vmem:[%s0 + $0x30] sm:$0xff]
    %v59 = vld [vmem:[%s0 + $0x38] sm:$0xff]
    %v60 = vld [vmem:[%s1] sm:$0x1f]
    %v61 = vld [vmem:[%s1 + $0x8] sm:$0x1f]
    %v62 = vld [vmem:[%s1 + $0x10] sm:$0x1f]
    %v63 = vld [vmem:[%s1 + $0x18] sm:$0x1f]
    %v64 = vld [vmem:[%s3] sm:$0xf]
    %v66 = vlaneseq
    %v67 = vshrl.u32 %v66, 7
    %v68 = vsub.s32 0, %v67
    %v69 = vrot.slane %v64, %v68
    %v70 = vlaneseq
    %v71 = vshrl.u32 %v70, 7
    %v72 = vsub.s32 1, %v71
    %v73 = vrot.slane %v64, %v72
    %v74 = vlaneseq
    %v75 = vshrl.u32 %v74, 7
    %v76 = vsub.s32 2, %v75
    %v77 = vrot.slane %v64, %v76
    %v78 = vlaneseq
    %v79 = vshrl.u32 %v78, 7
    %v80 = vsub.s32 3, %v79
    %v81 = vrot.slane %v64, %v80
    %vm86 = vcmask 39936
    %v88 = vsel %vm86, %v52, 0
    %v91 = vsel %vm86, %v53, 0
    %v94 = vsel %vm86, %v54, 0
    %v97 = vsel %vm86, %v55, 0
    %v100 = vsel %vm86, %v56, 0
    %v103 = vsel %vm86, %v57, 0
    %v106 = vsel %vm86, %v58, 0
    %v109 = vsel %vm86, %v59, 0
    %vm111 = vcmask 1044480
    %v113 = vsel %vm111, %v60, 0
    %v116 = vsel %vm111, %v61, 0
    %v119 = vsel %vm111, %v62, 0
    %v122 = vsel %vm111, %v63, 0
    %124 = vmatprep.subr.mxu0 0.0
    %125 = vmatpush1.msra.mxu0 0.0
    %126 = vmatprep.subr.mxu0 0.0
    %127 = vmatpush1.msra.mxu0 0.0
    %128 = vmatprep.subr.mxu0 0.0
    %129 = vmatpush1.msra.mxu0 0.0
    %130 = vmatprep.subr.mxu0 0.0
    %131 = vmatpush1.msra.mxu0 0.0
    %132 = vmatprep.subr.mxu0 0.0
    %133 = vmatpush1.msra.mxu0 0.0
    %134 = vmatprep.subr.mxu0 0.0
    %135 = vmatpush1.msra.mxu0 0.0
    %136 = vmatprep.subr.mxu0 0.0
    %137 = vmatpush1.msra.mxu0 0.0
    %138 = vmatprep.subr.mxu0 0.0
    %139 = vmatpush1.msra.mxu0 0.0
    %140 = vmatprep.subr.mxu0 0.0
    %141 = vmatpush1.msra.mxu0 0.0
    %142 = vmatprep.subr.mxu0 0.0
    %143 = vmatpush1.msra.mxu0 0.0
    %144 = vmatprep.subr.mxu0 0.0
    %145 = vmatpush1.msra.mxu0 0.0
    %146 = vmatprep.subr.mxu0 0.0
    %147 = vmatpush1.msra.mxu0 0.0
    %148 = vmatprep.subr.mxu0 0.0
    %149 = vmatpush1.msra.mxu0 0.0
    %150 = vmatprep.subr.mxu0 0.0
    %151 = vmatpush1.msra.mxu0 0.0
    %152 = vmatprep.subr.mxu0 0.0
    %153 = vmatpush1.msra.mxu0 0.0
    %154 = vmatprep.subr.mxu0 %v116
    %155 = vmatpush1.msra.mxu0 %v113
    %156 = vmatprep.subr.mxu0 0.0
    %157 = vmatpush2.msra.mxu0 0.0
    %158 = vmatprep.subr.mxu0 0.0
    %159 = vmatpush2.msra.mxu0 0.0
    %160 = vmatprep.subr.mxu0 0.0
    %161 = vmatpush2.msra.mxu0 0.0
    %162 = vmatprep.subr.mxu0 0.0
    %163 = vmatpush2.msra.mxu0 0.0
    %164 = vmatprep.subr.mxu0 0.0
    %165 = vmatpush2.msra.mxu0 0.0
    %166 = vmatprep.subr.mxu0 0.0
    %167 = vmatpush2.msra.mxu0 0.0
    %168 = vmatprep.subr.mxu0 0.0
    %169 = vmatpush2.msra.mxu0 0.0
    %170 = vmatprep.subr.mxu0 0.0
    %171 = vmatpush2.msra.mxu0 0.0
    %172 = vmatprep.subr.mxu0 0.0
    %173 = vmatpush2.msra.mxu0 0.0
    %174 = vmatprep.subr.mxu0 0.0
    %175 = vmatpush2.msra.mxu0 0.0
    %176 = vmatprep.subr.mxu0 0.0
    %177 = vmatpush2.msra.mxu0 0.0
    %178 = vmatprep.subr.mxu0 0.0
    %179 = vmatpush2.msra.mxu0 0.0
    %180 = vmatprep.subr.mxu0 0.0
    %181 = vmatpush2.msra.mxu0 0.0
    %182 = vmatprep.subr.mxu0 0.0
    %183 = vmatpush2.msra.mxu0 0.0
    %184 = vmatprep.subr.mxu0 0.0
    %185 = vmatpush2.msra.mxu0 0.0
    %186 = vmatprep.subr.mxu0 0.0
    %187 = vmatpush2.msra.mxu0 0.0
    %188 = vmatprep.mubr.f32.mxu0 0.0
    %189 = vmatmul.mubr.f32.gmra.mxu0 %v88
    %v190 = vpop.f32.mrf.mxu0
    %v191 = vadd.f32 %v69, %v190
    %v192 = vpop.f32.mrf.mxu0
    %v193 = vadd.f32 %v73, %v192
    %194 = vmatprep.mubr.f32.mxu0 0.0
    %195 = vmatmul.mubr.f32.gmra.mxu0 %v91
    %v196 = vpop.f32.mrf.mxu0
    %v197 = vadd.f32 %v69, %v196
    %v198 = vpop.f32.mrf.mxu0
    %v199 = vadd.f32 %v73, %v198
    %200 = vmatprep.mubr.f32.mxu0 0.0
    %201 = vmatmul.mubr.f32.gmra.mxu0 %v94
    %v202 = vpop.f32.mrf.mxu0
    %v203 = vadd.f32 %v69, %v202
    %v204 = vpop.f32.mrf.mxu0
    %v205 = vadd.f32 %v73, %v204
    %206 = vmatprep.mubr.f32.mxu0 0.0
    %207 = vmatmul.mubr.f32.gmra.mxu0 %v97
    %v208 = vpop.f32.mrf.mxu0
    %v209 = vadd.f32 %v69, %v208
    %v210 = vpop.f32.mrf.mxu0
    %v211 = vadd.f32 %v73, %v210
    %212 = vmatprep.mubr.f32.mxu0 0.0
    %213 = vmatmul.mubr.f32.gmra.mxu0 %v100
    %v214 = vpop.f32.mrf.mxu0
    %v215 = vadd.f32 %v69, %v214
    %v216 = vpop.f32.mrf.mxu0
    %v217 = vadd.f32 %v73, %v216
    %218 = vmatprep.mubr.f32.mxu0 0.0
    %219 = vmatmul.mubr.f32.gmra.mxu0 %v103
    %v220 = vpop.f32.mrf.mxu0
    %v221 = vadd.f32 %v69, %v220
    %v222 = vpop.f32.mrf.mxu0
    %v223 = vadd.f32 %v73, %v222
    %224 = vmatprep.mubr.f32.mxu0 0.0
    %225 = vmatmul.mubr.f32.gmra.mxu0 %v106
    %v226 = vpop.f32.mrf.mxu0
    %v227 = vadd.f32 %v69, %v226
    %v228 = vpop.f32.mrf.mxu0
    %v229 = vadd.f32 %v73, %v228
    %230 = vmatprep.mubr.f32.mxu0 0.0
    %231 = vmatmul.mubr.f32.gmra.mxu0 %v109
    %v232 = vpop.f32.mrf.mxu0
    %v233 = vadd.f32 %v69, %v232
    %v234 = vpop.f32.mrf.mxu0
    %v235 = vadd.f32 %v73, %v234
    %236 = vdwg.mxu0
    %237 = vmatprep.subr.mxu0 0.0
    %238 = vmatpush1.msra.mxu0 0.0
    %239 = vmatprep.subr.mxu0 0.0
    %240 = vmatpush1.msra.mxu0 0.0
    %241 = vmatprep.subr.mxu0 0.0
    %242 = vmatpush1.msra.mxu0 0.0
    %243 = vmatprep.subr.mxu0 0.0
    %244 = vmatpush1.msra.mxu0 0.0
    %245 = vmatprep.subr.mxu0 0.0
    %246 = vmatpush1.msra.mxu0 0.0
    %247 = vmatprep.subr.mxu0 0.0
    %248 = vmatpush1.msra.mxu0 0.0
    %249 = vmatprep.subr.mxu0 0.0
    %250 = vmatpush1.msra.mxu0 0.0
    %251 = vmatprep.subr.mxu0 0.0
    %252 = vmatpush1.msra.mxu0 0.0
    %253 = vmatprep.subr.mxu0 0.0
    %254 = vmatpush1.msra.mxu0 0.0
    %255 = vmatprep.subr.mxu0 0.0
    %256 = vmatpush1.msra.mxu0 0.0
    %257 = vmatprep.subr.mxu0 0.0
    %258 = vmatpush1.msra.mxu0 0.0
    %259 = vmatprep.subr.mxu0 0.0
    %260 = vmatpush1.msra.mxu0 0.0
    %261 = vmatprep.subr.mxu0 0.0
    %262 = vmatpush1.msra.mxu0 0.0
    %263 = vmatprep.subr.mxu0 0.0
    %264 = vmatpush1.msra.mxu0 0.0
    %265 = vmatprep.subr.mxu0 0.0
    %266 = vmatpush1.msra.mxu0 0.0
    %267 = vmatprep.subr.mxu0 %v122
    %268 = vmatpush1.msra.mxu0 %v119
    %269 = vmatprep.subr.mxu0 0.0
    %270 = vmatpush2.msra.mxu0 0.0
    %271 = vmatprep.subr.mxu0 0.0
    %272 = vmatpush2.msra.mxu0 0.0
    %273 = vmatprep.subr.mxu0 0.0
    %274 = vmatpush2.msra.mxu0 0.0
    %275 = vmatprep.subr.mxu0 0.0
    %276 = vmatpush2.msra.mxu0 0.0
    %277 = vmatprep.subr.mxu0 0.0
    %278 = vmatpush2.msra.mxu0 0.0
    %279 = vmatprep.subr.mxu0 0.0
    %280 = vmatpush2.msra.mxu0 0.0
    %281 = vmatprep.subr.mxu0 0.0
    %282 = vmatpush2.msra.mxu0 0.0
    %283 = vmatprep.subr.mxu0 0.0
    %284 = vmatpush2.msra.mxu0 0.0
    %285 = vmatprep.subr.mxu0 0.0
    %286 = vmatpush2.msra.mxu0 0.0
    %287 = vmatprep.subr.mxu0 0.0
    %288 = vmatpush2.msra.mxu0 0.0
    %289 = vmatprep.subr.mxu0 0.0
    %290 = vmatpush2.msra.mxu0 0.0
    %291 = vmatprep.subr.mxu0 0.0
    %292 = vmatpush2.msra.mxu0 0.0
    %293 = vmatprep.subr.mxu0 0.0
    %294 = vmatpush2.msra.mxu0 0.0
    %295 = vmatprep.subr.mxu0 0.0
    %296 = vmatpush2.msra.mxu0 0.0
    %297 = vmatprep.subr.mxu0 0.0
    %298 = vmatpush2.msra.mxu0 0.0
    %299 = vmatprep.subr.mxu0 0.0
    %300 = vmatpush2.msra.mxu0 0.0
    %301 = vmatprep.mubr.f32.mxu0 0.0
    %302 = vmatmul.mubr.f32.gmra.mxu0 %v88
    %v303 = vpop.f32.mrf.mxu0
    %v304 = vadd.f32 %v77, %v303
    %v305 = vpop.f32.mrf.mxu0
    %v306 = vadd.f32 %v81, %v305
    %307 = vmatprep.mubr.f32.mxu0 0.0
    %308 = vmatmul.mubr.f32.gmra.mxu0 %v91
    %v309 = vpop.f32.mrf.mxu0
    %v310 = vadd.f32 %v77, %v309
    %v311 = vpop.f32.mrf.mxu0
    %v312 = vadd.f32 %v81, %v311
    %313 = vmatprep.mubr.f32.mxu0 0.0
    %314 = vmatmul.mubr.f32.gmra.mxu0 %v94
    %v315 = vpop.f32.mrf.mxu0
    %v316 = vadd.f32 %v77, %v315
    %v317 = vpop.f32.mrf.mxu0
    %v318 = vadd.f32 %v81, %v317
    %319 = vmatprep.mubr.f32.mxu0 0.0
    %320 = vmatmul.mubr.f32.gmra.mxu0 %v97
    %v321 = vpop.f32.mrf.mxu0
    %v322 = vadd.f32 %v77, %v321
    %v323 = vpop.f32.mrf.mxu0
    %v324 = vadd.f32 %v81, %v323
    %325 = vmatprep.mubr.f32.mxu0 0.0
    %326 = vmatmul.mubr.f32.gmra.mxu0 %v100
    %v327 = vpop.f32.mrf.mxu0
    %v328 = vadd.f32 %v77, %v327
    %v329 = vpop.f32.mrf.mxu0
    %v330 = vadd.f32 %v81, %v329
    %331 = vmatprep.mubr.f32.mxu0 0.0
    %332 = vmatmul.mubr.f32.gmra.mxu0 %v103
    %v333 = vpop.f32.mrf.mxu0
    %v334 = vadd.f32 %v77, %v333
    %v335 = vpop.f32.mrf.mxu0
    %v336 = vadd.f32 %v81, %v335
    %337 = vmatprep.mubr.f32.mxu0 0.0
    %338 = vmatmul.mubr.f32.gmra.mxu0 %v106
    %v339 = vpop.f32.mrf.mxu0
    %v340 = vadd.f32 %v77, %v339
    %v341 = vpop.f32.mrf.mxu0
    %v342 = vadd.f32 %v81, %v341
    %343 = vmatprep.mubr.f32.mxu0 0.0
    %344 = vmatmul.mubr.f32.gmra.mxu0 %v109
    %v345 = vpop.f32.mrf.mxu0
    %v346 = vadd.f32 %v77, %v345
    %v347 = vpop.f32.mrf.mxu0
    %v348 = vadd.f32 %v81, %v347
    %349 = vdwg.mxu0
    %350 = vst [vmem:[#allocation2] sm:$0xff] %v191
    %351 = vst [vmem:[#allocation2 + $0x8] sm:$0xff] %v193
    %352 = vst [vmem:[#allocation2 + $0x10] sm:$0xff] %v304
    %353 = vst [vmem:[#allocation2 + $0x18] sm:$0xff] %v306
    %354 = vst [vmem:[#allocation2 + $0x20] sm:$0xff] %v197
    %355 = vst [vmem:[#allocation2 + $0x28] sm:$0xff] %v199
    %356 = vst [vmem:[#allocation2 + $0x30] sm:$0xff] %v310
    %357 = vst [vmem:[#allocation2 + $0x38] sm:$0xff] %v312
    %358 = vst [vmem:[#allocation2 + $0x40] sm:$0xff] %v203
    %359 = vst [vmem:[#allocation2 + $0x48] sm:$0xff] %v205
    %360 = vst [vmem:[#allocation2 + $0x50] sm:$0xff] %v316
    %361 = vst [vmem:[#allocation2 + $0x58] sm:$0xff] %v318
    %362 = vst [vmem:[#allocation2 + $0x60] sm:$0xff] %v209
    %363 = vst [vmem:[#allocation2 + $0x68] sm:$0xff] %v211
    %364 = vst [vmem:[#allocation2 + $0x70] sm:$0xff] %v322
    %365 = vst [vmem:[#allocation2 + $0x78] sm:$0xff] %v324
    %366 = vst [vmem:[#allocation2 + $0x80] sm:$0xff] %v215
    %367 = vst [vmem:[#allocation2 + $0x88] sm:$0xff] %v217
    %368 = vst [vmem:[#allocation2 + $0x90] sm:$0xff] %v328
    %369 = vst [vmem:[#allocation2 + $0x98] sm:$0xff] %v330
    %370 = vst [vmem:[#allocation2 + $0xa0] sm:$0xff] %v221
    %371 = vst [vmem:[#allocation2 + $0xa8] sm:$0xff] %v223
    %372 = vst [vmem:[#allocation2 + $0xb0] sm:$0xff] %v334
    %373 = vst [vmem:[#allocation2 + $0xb8] sm:$0xff] %v336
    %374 = vst [vmem:[#allocation2 + $0xc0] sm:$0xff] %v227
    %375 = vst [vmem:[#allocation2 + $0xc8] sm:$0xff] %v229
    %376 = vst [vmem:[#allocation2 + $0xd0] sm:$0xff] %v340
    %377 = vst [vmem:[#allocation2 + $0xd8] sm:$0xff] %v342
    %378 = vst [vmem:[#allocation2 + $0xe0] sm:$0xff] %v233
    %379 = vst [vmem:[#allocation2 + $0xe8] sm:$0xff] %v235
    %380 = vst [vmem:[#allocation2 + $0xf0] sm:$0xff] %v346
    %381 = vst [vmem:[#allocation2 + $0xf8] sm:$0xff] %v348
    %v382 = vld [vmem:[#allocation3] sm:$0xff]
    %v383 = vld [vmem:[#allocation3 + $0x8] sm:$0xff]
    %v384 = vld [vmem:[#allocation3 + $0x10] sm:$0xff]
    %v385 = vld [vmem:[#allocation3 + $0x18] sm:$0xff]
    %v386 = vld [vmem:[#allocation3 + $0x20] sm:$0xff]
    %v387 = vld [vmem:[#allocation3 + $0x28] sm:$0xff]
    %v388 = vld [vmem:[#allocation3 + $0x30] sm:$0xff]
    %v389 = vld [vmem:[#allocation3 + $0x38] sm:$0xff]
    %v390 = vld [vmem:[#allocation3 + $0x40] sm:$0xff]
    %v391 = vld [vmem:[#allocation3 + $0x48] sm:$0xff]
    %v392 = vld [vmem:[#allocation3 + $0x50] sm:$0xff]
    %v393 = vld [vmem:[#allocation3 + $0x58] sm:$0xff]
    %v394 = vld [vmem:[#allocation3 + $0x60] sm:$0xff]
    %v395 = vld [vmem:[#allocation3 + $0x68] sm:$0xff]
    %v396 = vld [vmem:[#allocation3 + $0x70] sm:$0xff]
    %v397 = vld [vmem:[#allocation3 + $0x78] sm:$0xff]
    %v398 = vld [vmem:[#allocation3 + $0x80] sm:$0xff]
    %v399 = vld [vmem:[#allocation3 + $0x88] sm:$0xff]
    %v400 = vld [vmem:[#allocation3 + $0x90] sm:$0xff]
    %v401 = vld [vmem:[#allocation3 + $0x98] sm:$0xff]
    %v402 = vld [vmem:[#allocation3 + $0xa0] sm:$0xff]
    %v403 = vld [vmem:[#allocation3 + $0xa8] sm:$0xff]
    %v404 = vld [vmem:[#allocation3 + $0xb0] sm:$0xff]
    %v405 = vld [vmem:[#allocation3 + $0xb8] sm:$0xff]
    %v406 = vld [vmem:[#allocation3 + $0xc0] sm:$0xff]
    %v407 = vld [vmem:[#allocation3 + $0xc8] sm:$0xff]
    %v408 = vld [vmem:[#allocation3 + $0xd0] sm:$0xff]
    %v409 = vld [vmem:[#allocation3 + $0xd8] sm:$0xff]
    %v410 = vld [vmem:[#allocation3 + $0xe0] sm:$0xff]
    %v411 = vld [vmem:[#allocation3 + $0xe8] sm:$0xff]
    %v412 = vld [vmem:[#allocation3 + $0xf0] sm:$0xff]
    %v413 = vld [vmem:[#allocation3 + $0xf8] sm:$0xff]
    %v414 = vld [vmem:[#allocation3 + $0x100] sm:$0xff]
    %v415 = vld [vmem:[#allocation3 + $0x108] sm:$0xff]
    %v416 = vld [vmem:[#allocation3 + $0x110] sm:$0xff]
    %v417 = vld [vmem:[#allocation3 + $0x118] sm:$0xff]
    %v418 = vld [vmem:[#allocation3 + $0x120] sm:$0xff]
    %v419 = vld [vmem:[#allocation3 + $0x128] sm:$0xff]
    %v420 = vld [vmem:[#allocation3 + $0x130] sm:$0xff]
    %v421 = vld [vmem:[#allocation3 + $0x138] sm:$0xff]
    %v422 = vld [vmem:[#allocation3 + $0x140] sm:$0xff]
    %v423 = vld [vmem:[#allocation3 + $0x148] sm:$0xff]
    %v424 = vld [vmem:[#allocation3 + $0x150] sm:$0xff]
    %v425 = vld [vmem:[#allocation3 + $0x158] sm:$0xff]
    %v426 = vld [vmem:[#allocation3 + $0x160] sm:$0xff]
    %v427 = vld [vmem:[#allocation3 + $0x168] sm:$0xff]
    %v428 = vld [vmem:[#allocation3 + $0x170] sm:$0xff]
    %v429 = vld [vmem:[#allocation3 + $0x178] sm:$0xff]
    %v430 = vld [vmem:[#allocation3 + $0x180] sm:$0xff]
    %v431 = vld [vmem:[#allocation3 + $0x188] sm:$0xff]
    %v432 = vld [vmem:[#allocation3 + $0x190] sm:$0xff]
    %v433 = vld [vmem:[#allocation3 + $0x198] sm:$0xff]
    %v434 = vld [vmem:[#allocation3 + $0x1a0] sm:$0xff]
    %v435 = vld [vmem:[#allocation3 + $0x1a8] sm:$0xff]
    %v436 = vld [vmem:[#allocation3 + $0x1b0] sm:$0xff]
    %v437 = vld [vmem:[#allocation3 + $0x1b8] sm:$0xff]
    %v438 = vld [vmem:[#allocation3 + $0x1c0] sm:$0xff]
    %v439 = vld [vmem:[#allocation3 + $0x1c8] sm:$0xff]
    %v440 = vld [vmem:[#allocation3 + $0x1d0] sm:$0xff]
    %v441 = vld [vmem:[#allocation3 + $0x1d8] sm:$0xff]
    %v442 = vld [vmem:[#allocation3 + $0x1e0] sm:$0xff]
    %v443 = vld [vmem:[#allocation3 + $0x1e8] sm:$0xff]
    %v444 = vld [vmem:[#allocation3 + $0x1f0] sm:$0xff]
    %v445 = vld [vmem:[#allocation3 + $0x1f8] sm:$0xff]
    %v446 = vld [vmem:[#allocation2] sm:$0xff]
    %v447 = vld [vmem:[#allocation2 + $0x8] sm:$0xff]
    %v448 = vld [vmem:[#allocation2 + $0x10] sm:$0xff]
    %v449 = vld [vmem:[#allocation2 + $0x18] sm:$0xff]
    %450 = vmatprep.subr.mxu0 %v443
    %451 = vmatpush1.msra.mxu0 %v442
    %452 = vmatprep.subr.mxu0 %v439
    %453 = vmatpush1.msra.mxu0 %v438
    %454 = vmatprep.subr.mxu0 %v435
    %455 = vmatpush1.msra.mxu0 %v434
    %456 = vmatprep.subr.mxu0 %v431
    %457 = vmatpush1.msra.mxu0 %v430
    %458 = vmatprep.subr.mxu0 %v427
    %459 = vmatpush1.msra.mxu0 %v426
    %460 = vmatprep.subr.mxu0 %v423
    %461 = vmatpush1.msra.mxu0 %v422
    %462 = vmatprep.subr.mxu0 %v419
    %463 = vmatpush1.msra.mxu0 %v418
    %464 = vmatprep.subr.mxu0 %v415
    %465 = vmatpush1.msra.mxu0 %v414
    %466 = vmatprep.subr.mxu0 %v411
    %467 = vmatpush1.msra.mxu0 %v410
    %468 = vmatprep.subr.mxu0 %v407
    %469 = vmatpush1.msra.mxu0 %v406
    %470 = vmatprep.subr.mxu0 %v403
    %471 = vmatpush1.msra.mxu0 %v402
    %472 = vmatprep.subr.mxu0 %v399
    %473 = vmatpush1.msra.mxu0 %v398
    %474 = vmatprep.subr.mxu0 %v395
    %475 = vmatpush1.msra.mxu0 %v394
    %476 = vmatprep.subr.mxu0 %v391
    %477 = vmatpush1.msra.mxu0 %v390
    %478 = vmatprep.subr.mxu0 %v387
    %479 = vmatpush1.msra.mxu0 %v386
    %480 = vmatprep.subr.mxu0 %v383
    %481 = vmatpush1.msra.mxu0 %v382
    %482 = vmatprep.subr.mxu0 0.0
    %483 = vmatpush2.msra.mxu0 0.0
    %484 = vmatprep.subr.mxu0 0.0
    %485 = vmatpush2.msra.mxu0 0.0
    %486 = vmatprep.subr.mxu0 0.0
    %487 = vmatpush2.msra.mxu0 0.0
    %488 = vmatprep.subr.mxu0 0.0
    %489 = vmatpush2.msra.mxu0 0.0
    %490 = vmatprep.subr.mxu0 0.0
    %491 = vmatpush2.msra.mxu0 0.0
    %492 = vmatprep.subr.mxu0 0.0
    %493 = vmatpush2.msra.mxu0 0.0
    %494 = vmatprep.subr.mxu0 0.0
    %495 = vmatpush2.msra.mxu0 0.0
    %496 = vmatprep.subr.mxu0 0.0
    %497 = vmatpush2.msra.mxu0 0.0
    %498 = vmatprep.subr.mxu0 0.0
    %499 = vmatpush2.msra.mxu0 0.0
    %500 = vmatprep.subr.mxu0 0.0
    %501 = vmatpush2.msra.mxu0 0.0
    %502 = vmatprep.subr.mxu0 0.0
    %503 = vmatpush2.msra.mxu0 0.0
    %504 = vmatprep.subr.mxu0 0.0
    %505 = vmatpush2.msra.mxu0 0.0
    %506 = vmatprep.subr.mxu0 0.0
    %507 = vmatpush2.msra.mxu0 0.0
    %508 = vmatprep.subr.mxu0 0.0
    %509 = vmatpush2.msra.mxu0 0.0
    %510 = vmatprep.subr.mxu0 0.0
    %511 = vmatpush2.msra.mxu0 0.0
    %512 = vmatprep.subr.mxu0 0.0
    %513 = vmatpush2.msra.mxu0 0.0
    %514 = vmatprep.mubr.f32.mxu0 0.0
    %515 = vmatmul.mubr.f32.gmra.mxu0 0.0
    %v516 = vpop.f32.mrf.mxu0
    %v517 = vadd.f32 0.0, %v516
    %v518 = vpop.f32.mrf.mxu0
    %v519 = vadd.f32 0.0, %v518
    %520 = vdwg.mxu0
    %521 = vmatprep.subr.mxu0 %v445
    %522 = vmatpush1.msra.mxu0 %v444
    %523 = vmatprep.subr.mxu0 %v441
    %524 = vmatpush1.msra.mxu0 %v440
    %525 = vmatprep.subr.mxu0 %v437
    %526 = vmatpush1.msra.mxu0 %v436
    %527 = vmatprep.subr.mxu0 %v433
    %528 = vmatpush1.msra.mxu0 %v432
    %529 = vmatprep.subr.mxu0 %v429
    %530 = vmatpush1.msra.mxu0 %v428
    %531 = vmatprep.subr.mxu0 %v425
    %532 = vmatpush1.msra.mxu0 %v424
    %533 = vmatprep.subr.mxu0 %v421
    %534 = vmatpush1.msra.mxu0 %v420
    %535 = vmatprep.subr.mxu0 %v417
    %536 = vmatpush1.msra.mxu0 %v416
    %537 = vmatprep.subr.mxu0 %v413
    %538 = vmatpush1.msra.mxu0 %v412
    %539 = vmatprep.subr.mxu0 %v409
    %540 = vmatpush1.msra.mxu0 %v408
    %541 = vmatprep.subr.mxu0 %v405
    %542 = vmatpush1.msra.mxu0 %v404
    %543 = vmatprep.subr.mxu0 %v401
    %544 = vmatpush1.msra.mxu0 %v400
    %545 = vmatprep.subr.mxu0 %v397
    %546 = vmatpush1.msra.mxu0 %v396
    %547 = vmatprep.subr.mxu0 %v393
    %548 = vmatpush1.msra.mxu0 %v392
    %549 = vmatprep.subr.mxu0 %v389
    %550 = vmatpush1.msra.mxu0 %v388
    %551 = vmatprep.subr.mxu0 %v385
    %552 = vmatpush1.msra.mxu0 %v384
    %553 = vmatprep.subr.mxu0 0.0
    %554 = vmatpush2.msra.mxu0 0.0
    %555 = vmatprep.subr.mxu0 0.0
    %556 = vmatpush2.msra.mxu0 0.0
    %557 = vmatprep.subr.mxu0 0.0
    %558 = vmatpush2.msra.mxu0 0.0
    %559 = vmatprep.subr.mxu0 0.0
    %560 = vmatpush2.msra.mxu0 0.0
    %561 = vmatprep.subr.mxu0 0.0
    %562 = vmatpush2.msra.mxu0 0.0
    %563 = vmatprep.subr.mxu0 0.0
    %564 = vmatpush2.msra.mxu0 0.0
    %565 = vmatprep.subr.mxu0 0.0
    %566 = vmatpush2.msra.mxu0 0.0
    %567 = vmatprep.subr.mxu0 0.0
    %568 = vmatpush2.msra.mxu0 0.0
    %569 = vmatprep.subr.mxu0 0.0
    %570 = vmatpush2.msra.mxu0 0.0
    %571 = vmatprep.subr.mxu0 0.0
    %572 = vmatpush2.msra.mxu0 0.0
    %573 = vmatprep.subr.mxu0 0.0
    %574 = vmatpush2.msra.mxu0 0.0
    %575 = vmatprep.subr.mxu0 0.0
    %576 = vmatpush2.msra.mxu0 0.0
    %577 = vmatprep.subr.mxu0 0.0
    %578 = vmatpush2.msra.mxu0 0.0
    %579 = vmatprep.subr.mxu0 0.0
    %580 = vmatpush2.msra.mxu0 0.0
    %581 = vmatprep.subr.mxu0 0.0
    %582 = vmatpush2.msra.mxu0 0.0
    %583 = vmatprep.subr.mxu0 0.0
    %584 = vmatpush2.msra.mxu0 0.0
    %585 = vmatprep.mubr.f32.mxu0 0.0
    %586 = vmatmul.mubr.f32.gmra.mxu0 0.0
    %v587 = vpop.f32.mrf.mxu0
    %v588 = vadd.f32 0.0, %v587
    %v589 = vpop.f32.mrf.mxu0
    %v590 = vadd.f32 0.0, %v589
    %591 = vdwg.mxu0
    %v592 = vadd.f32 %v446, %v517
    %v593 = vadd.f32 %v447, %v519
    %v594 = vadd.f32 %v448, %v588
    %v595 = vadd.f32 %v449, %v590
    %v596 = vxor.u32 %v592, 2147483648
    %v597 = vxor.u32 %v593, 2147483648
    %v598 = vxor.u32 %v594, 2147483648
    %v599 = vmul.f32 %v596, 1.442695
    %v600 = vpow.pop %v599
    %v601 = vmul.f32 %v597, 1.442695
    %v602 = vpow.pop %v601
    %v603 = vmul.f32 %v598, 1.442695
    %v604 = vpow.pop %v603
    %v605 = vadd.f32 %v600, 1.0
    %v606 = vadd.f32 %v602, 1.0
    %v607 = vadd.f32 %v604, 1.0
    %v608 = vrcp.pop %v605
    %v609 = vmul.f32 1.0, %v608
    %v610 = vrcp.pop %v606
    %v611 = vmul.f32 1.0, %v610
    %v612 = vrcp.pop %v607
    %v613 = vmul.f32 1.0, %v612
    %v614 = vtanh.pop %v595
    %v615 = vmul.f32 %v611, 0.0
    %v616 = vmul.f32 %v609, %v614
    %v617 = vadd.f32 %v615, %v616
    %v618 = vtanh.pop %v617
    %v619 = vmul.f32 %v613, %v618
    %v620 = vld [vmem:[#allocation2 + $0x20] sm:$0xff]
    %v621 = vld [vmem:[#allocation2 + $0x28] sm:$0xff]
    %v622 = vld [vmem:[#allocation2 + $0x30] sm:$0xff]
    %v623 = vld [vmem:[#allocation2 + $0x38] sm:$0xff]
    %624 = vmatprep.subr.mxu0 %v443
    %625 = vmatpush1.msra.mxu0 %v442
    %626 = vmatprep.subr.mxu0 %v439
    %627 = vmatpush1.msra.mxu0 %v438
    %628 = vmatprep.subr.mxu0 %v435
    %629 = vmatpush1.msra.mxu0 %v434
    %630 = vmatprep.subr.mxu0 %v431
    %631 = vmatpush1.msra.mxu0 %v430
    %632 = vmatprep.subr.mxu0 %v427
    %633 = vmatpush1.msra.mxu0 %v426
    %634 = vmatprep.subr.mxu0 %v423
    %635 = vmatpush1.msra.mxu0 %v422
    %636 = vmatprep.subr.mxu0 %v419
    %637 = vmatpush1.msra.mxu0 %v418
    %638 = vmatprep.subr.mxu0 %v415
    %639 = vmatpush1.msra.mxu0 %v414
    %640 = vmatprep.subr.mxu0 %v411
    %641 = vmatpush1.msra.mxu0 %v410
    %642 = vmatprep.subr.mxu0 %v407
    %643 = vmatpush1.msra.mxu0 %v406
    %644 = vmatprep.subr.mxu0 %v403
    %645 = vmatpush1.msra.mxu0 %v402
    %646 = vmatprep.subr.mxu0 %v399
    %647 = vmatpush1.msra.mxu0 %v398
    %648 = vmatprep.subr.mxu0 %v395
    %649 = vmatpush1.msra.mxu0 %v394
    %650 = vmatprep.subr.mxu0 %v391
    %651 = vmatpush1.msra.mxu0 %v390
    %652 = vmatprep.subr.mxu0 %v387
    %653 = vmatpush1.msra.mxu0 %v386
    %654 = vmatprep.subr.mxu0 %v383
    %655 = vmatpush1.msra.mxu0 %v382
    %656 = vmatprep.subr.mxu0 0.0
    %657 = vmatpush2.msra.mxu0 0.0
    %658 = vmatprep.subr.mxu0 0.0
    %659 = vmatpush2.msra.mxu0 0.0
    %660 = vmatprep.subr.mxu0 0.0
    %661 = vmatpush2.msra.mxu0 0.0
    %662 = vmatprep.subr.mxu0 0.0
    %663 = vmatpush2.msra.mxu0 0.0
    %664 = vmatprep.subr.mxu0 0.0
    %665 = vmatpush2.msra.mxu0 0.0
    %666 = vmatprep.subr.mxu0 0.0
    %667 = vmatpush2.msra.mxu0 0.0
    %668 = vmatprep.subr.mxu0 0.0
    %669 = vmatpush2.msra.mxu0 0.0
    %670 = vmatprep.subr.mxu0 0.0
    %671 = vmatpush2.msra.mxu0 0.0
    %672 = vmatprep.subr.mxu0 0.0
    %673 = vmatpush2.msra.mxu0 0.0
    %674 = vmatprep.subr.mxu0 0.0
    %675 = vmatpush2.msra.mxu0 0.0
    %676 = vmatprep.subr.mxu0 0.0
    %677 = vmatpush2.msra.mxu0 0.0
    %678 = vmatprep.subr.mxu0 0.0
    %679 = vmatpush2.msra.mxu0 0.0
    %680 = vmatprep.subr.mxu0 0.0
    %681 = vmatpush2.msra.mxu0 0.0
    %682 = vmatprep.subr.mxu0 0.0
    %683 = vmatpush2.msra.mxu0 0.0
    %684 = vmatprep.subr.mxu0 0.0
    %685 = vmatpush2.msra.mxu0 0.0
    %686 = vmatprep.subr.mxu0 0.0
    %687 = vmatpush2.msra.mxu0 0.0
    %688 = vmatprep.mubr.f32.mxu0 0.0
    %689 = vmatmul.mubr.f32.gmra.mxu0 %v619
    %v690 = vpop.f32.mrf.mxu0
    %v691 = vadd.f32 0.0, %v690
    %v692 = vpop.f32.mrf.mxu0
    %v693 = vadd.f32 0.0, %v692
    %694 = vdwg.mxu0
    %695 = vmatprep.subr.mxu0 %v445
    %696 = vmatpush1.msra.mxu0 %v444
    %697 = vmatprep.subr.mxu0 %v441
    %698 = vmatpush1.msra.mxu0 %v440
    %699 = vmatprep.subr.mxu0 %v437
    %700 = vmatpush1.msra.mxu0 %v436
    %701 = vmatprep.subr.mxu0 %v433
    %702 = vmatpush1.msra.mxu0 %v432
    %703 = vmatprep.subr.mxu0 %v429
    %704 = vmatpush1.msra.mxu0 %v428
    %705 = vmatprep.subr.mxu0 %v425
    %706 = vmatpush1.msra.mxu0 %v424
    %707 = vmatprep.subr.mxu0 %v421
    %708 = vmatpush1.msra.mxu0 %v420
    %709 = vmatprep.subr.mxu0 %v417
    %710 = vmatpush1.msra.mxu0 %v416
    %711 = vmatprep.subr.mxu0 %v413
    %712 = vmatpush1.msra.mxu0 %v412
    %713 = vmatprep.subr.mxu0 %v409
    %714 = vmatpush1.msra.mxu0 %v408
    %715 = vmatprep.subr.mxu0 %v405
    %716 = vmatpush1.msra.mxu0 %v404
    %717 = vmatprep.subr.mxu0 %v401
    %718 = vmatpush1.msra.mxu0 %v400
    %719 = vmatprep.subr.mxu0 %v397
    %720 = vmatpush1.msra.mxu0 %v396
    %721 = vmatprep.subr.mxu0 %v393
    %722 = vmatpush1.msra.mxu0 %v392
    %723 = vmatprep.subr.mxu0 %v389
    %724 = vmatpush1.msra.mxu0 %v388
    %725 = vmatprep.subr.mxu0 %v385
    %726 = vmatpush1.msra.mxu0 %v384
    %727 = vmatprep.subr.mxu0 0.0
    %728 = vmatpush2.msra.mxu0 0.0
    %729 = vmatprep.subr.mxu0 0.0
    %730 = vmatpush2.msra.mxu0 0.0
    %731 = vmatprep.subr.mxu0 0.0
    %732 = vmatpush2.msra.mxu0 0.0
    %733 = vmatprep.subr.mxu0 0.0
    %734 = vmatpush2.msra.mxu0 0.0
    %735 = vmatprep.subr.mxu0 0.0
    %736 = vmatpush2.msra.mxu0 0.0
    %737 = vmatprep.subr.mxu0 0.0
    %738 = vmatpush2.msra.mxu0 0.0
    %739 = vmatprep.subr.mxu0 0.0
    %740 = vmatpush2.msra.mxu0 0.0
    %741 = vmatprep.subr.mxu0 0.0
    %742 = vmatpush2.msra.mxu0 0.0
    %743 = vmatprep.subr.mxu0 0.0
    %744 = vmatpush2.msra.mxu0 0.0
    %745 = vmatprep.subr.mxu0 0.0
    %746 = vmatpush2.msra.mxu0 0.0
    %747 = vmatprep.subr.mxu0 0.0
    %748 = vmatpush2.msra.mxu0 0.0
    %749 = vmatprep.subr.mxu0 0.0
    %750 = vmatpush2.msra.mxu0 0.0
    %751 = vmatprep.subr.mxu0 0.0
    %752 = vmatpush2.msra.mxu0 0.0
    %753 = vmatprep.subr.mxu0 0.0
    %754 = vmatpush2.msra.mxu0 0.0
    %755 = vmatprep.subr.mxu0 0.0
    %756 = vmatpush2.msra.mxu0 0.0
    %757 = vmatprep.subr.mxu0 0.0
    %758 = vmatpush2.msra.mxu0 0.0
    %759 = vmatprep.mubr.f32.mxu0 0.0
    %760 = vmatmul.mubr.f32.gmra.mxu0 %v619
    %v761 = vpop.f32.mrf.mxu0
    %v762 = vadd.f32 0.0, %v761
    %v763 = vpop.f32.mrf.mxu0
    %v764 = vadd.f32 0.0, %v763
    %765 = vdwg.mxu0
    %v766 = vadd.f32 %v620, %v691
    %v767 = vadd.f32 %v621, %v693
    %v768 = vadd.f32 %v622, %v762
    %v769 = vadd.f32 %v623, %v764
    %v770 = vxor.u32 %v766, 2147483648
    %v771 = vxor.u32 %v767, 2147483648
    %v772 = vxor.u32 %v768, 2147483648
    %v773 = vmul.f32 %v770, 1.442695
    %v774 = vpow.pop %v773
    %v775 = vmul.f32 %v771, 1.442695
    %v776 = vpow.pop %v775
    %v777 = vmul.f32 %v772, 1.442695
    %v778 = vpow.pop %v777
    %v779 = vadd.f32 %v774, 1.0
    %v780 = vadd.f32 %v776, 1.0
    %v781 = vadd.f32 %v778, 1.0
    %v782 = vrcp.pop %v779
    %v783 = vmul.f32 1.0, %v782
    %v784 = vrcp.pop %v780
    %v785 = vmul.f32 1.0, %v784
    %v786 = vrcp.pop %v781
    %v787 = vmul.f32 1.0, %v786
    %v788 = vtanh.pop %v769
    %v789 = vmul.f32 %v785, %v617
    %v790 = vmul.f32 %v783, %v788
    %v791 = vadd.f32 %v789, %v790
    %v792 = vtanh.pop %v791
    %v793 = vmul.f32 %v787, %v792
    %v794 = vld [vmem:[#allocation2 + $0x40] sm:$0xff]
    %v795 = vld [vmem:[#allocation2 + $0x48] sm:$0xff]
    %v796 = vld [vmem:[#allocation2 + $0x50] sm:$0xff]
    %v797 = vld [vmem:[#allocation2 + $0x58] sm:$0xff]
    %798 = vmatprep.subr.mxu0 %v443
    %799 = vmatpush1.msra.mxu0 %v442
    %800 = vmatprep.subr.mxu0 %v439
    %801 = vmatpush1.msra.mxu0 %v438
    %802 = vmatprep.subr.mxu0 %v435
    %803 = vmatpush1.msra.mxu0 %v434
    %804 = vmatprep.subr.mxu0 %v431
    %805 = vmatpush1.msra.mxu0 %v430
    %806 = vmatprep.subr.mxu0 %v427
    %807 = vmatpush1.msra.mxu0 %v426
    %808 = vmatprep.subr.mxu0 %v423
    %809 = vmatpush1.msra.mxu0 %v422
    %810 = vmatprep.subr.mxu0 %v419
    %811 = vmatpush1.msra.mxu0 %v418
    %812 = vmatprep.subr.mxu0 %v415
    %813 = vmatpush1.msra.mxu0 %v414
    %814 = vmatprep.subr.mxu0 %v411
    %815 = vmatpush1.msra.mxu0 %v410
    %816 = vmatprep.subr.mxu0 %v407
    %817 = vmatpush1.msra.mxu0 %v406
    %818 = vmatprep.subr.mxu0 %v403
    %819 = vmatpush1.msra.mxu0 %v402
    %820 = vmatprep.subr.mxu0 %v399
    %821 = vmatpush1.msra.mxu0 %v398
    %822 = vmatprep.subr.mxu0 %v395
    %823 = vmatpush1.msra.mxu0 %v394
    %824 = vmatprep.subr.mxu0 %v391
    %825 = vmatpush1.msra.mxu0 %v390
    %826 = vmatprep.subr.mxu0 %v387
    %827 = vmatpush1.msra.mxu0 %v386
    %828 = vmatprep.subr.mxu0 %v383
    %829 = vmatpush1.msra.mxu0 %v382
    %830 = vmatprep.subr.mxu0 0.0
    %831 = vmatpush2.msra.mxu0 0.0
    %832 = vmatprep.subr.mxu0 0.0
    %833 = vmatpush2.msra.mxu0 0.0
    %834 = vmatprep.subr.mxu0 0.0
    %835 = vmatpush2.msra.mxu0 0.0
    %836 = vmatprep.subr.mxu0 0.0
    %837 = vmatpush2.msra.mxu0 0.0
    %838 = vmatprep.subr.mxu0 0.0
    %839 = vmatpush2.msra.mxu0 0.0
    %840 = vmatprep.subr.mxu0 0.0
    %841 = vmatpush2.msra.mxu0 0.0
    %842 = vmatprep.subr.mxu0 0.0
    %843 = vmatpush2.msra.mxu0 0.0
    %844 = vmatprep.subr.mxu0 0.0
    %845 = vmatpush2.msra.mxu0 0.0
    %846 = vmatprep.subr.mxu0 0.0
    %847 = vmatpush2.msra.mxu0 0.0
    %848 = vmatprep.subr.mxu0 0.0
    %849 = vmatpush2.msra.mxu0 0.0
    %850 = vmatprep.subr.mxu0 0.0
    %851 = vmatpush2.msra.mxu0 0.0
    %852 = vmatprep.subr.mxu0 0.0
    %853 = vmatpush2.msra.mxu0 0.0
    %854 = vmatprep.subr.mxu0 0.0
    %855 = vmatpush2.msra.mxu0 0.0
    %856 = vmatprep.subr.mxu0 0.0
    %857 = vmatpush2.msra.mxu0 0.0
    %858 = vmatprep.subr.mxu0 0.0
    %859 = vmatpush2.msra.mxu0 0.0
    %860 = vmatprep.subr.mxu0 0.0
    %861 = vmatpush2.msra.mxu0 0.0
    %862 = vmatprep.mubr.f32.mxu0 0.0
    %863 = vmatmul.mubr.f32.gmra.mxu0 %v793
    %v864 = vpop.f32.mrf.mxu0
    %v865 = vadd.f32 0.0, %v864
    %v866 = vpop.f32.mrf.mxu0
    %v867 = vadd.f32 0.0, %v866
    %868 = vdwg.mxu0
    %869 = vmatprep.subr.mxu0 %v445
    %870 = vmatpush1.msra.mxu0 %v444
    %871 = vmatprep.subr.mxu0 %v441
    %872 = vmatpush1.msra.mxu0 %v440
    %873 = vmatprep.subr.mxu0 %v437
    %874 = vmatpush1.msra.mxu0 %v436
    %875 = vmatprep.subr.mxu0 %v433
    %876 = vmatpush1.msra.mxu0 %v432
    %877 = vmatprep.subr.mxu0 %v429
    %878 = vmatpush1.msra.mxu0 %v428
    %879 = vmatprep.subr.mxu0 %v425
    %880 = vmatpush1.msra.mxu0 %v424
    %881 = vmatprep.subr.mxu0 %v421
    %882 = vmatpush1.msra.mxu0 %v420
    %883 = vmatprep.subr.mxu0 %v417
    %884 = vmatpush1.msra.mxu0 %v416
    %885 = vmatprep.subr.mxu0 %v413
    %886 = vmatpush1.msra.mxu0 %v412
    %887 = vmatprep.subr.mxu0 %v409
    %888 = vmatpush1.msra.mxu0 %v408
    %889 = vmatprep.subr.mxu0 %v405
    %890 = vmatpush1.msra.mxu0 %v404
    %891 = vmatprep.subr.mxu0 %v401
    %892 = vmatpush1.msra.mxu0 %v400
    %893 = vmatprep.subr.mxu0 %v397
    %894 = vmatpush1.msra.mxu0 %v396
    %895 = vmatprep.subr.mxu0 %v393
    %896 = vmatpush1.msra.mxu0 %v392
    %897 = vmatprep.subr.mxu0 %v389
    %898 = vmatpush1.msra.mxu0 %v388
    %899 = vmatprep.subr.mxu0 %v385
    %900 = vmatpush1.msra.mxu0 %v384
    %901 = vmatprep.subr.mxu0 0.0
    %902 = vmatpush2.msra.mxu0 0.0
    %903 = vmatprep.subr.mxu0 0.0
    %904 = vmatpush2.msra.mxu0 0.0
    %905 = vmatprep.subr.mxu0 0.0
    %906 = vmatpush2.msra.mxu0 0.0
    %907 = vmatprep.subr.mxu0 0.0
    %908 = vmatpush2.msra.mxu0 0.0
    %909 = vmatprep.subr.mxu0 0.0
    %910 = vmatpush2.msra.mxu0 0.0
    %911 = vmatprep.subr.mxu0 0.0
    %912 = vmatpush2.msra.mxu0 0.0
    %913 = vmatprep.subr.mxu0 0.0
    %914 = vmatpush2.msra.mxu0 0.0
    %915 = vmatprep.subr.mxu0 0.0
    %916 = vmatpush2.msra.mxu0 0.0
    %917 = vmatprep.subr.mxu0 0.0
    %918 = vmatpush2.msra.mxu0 0.0
    %919 = vmatprep.subr.mxu0 0.0
    %920 = vmatpush2.msra.mxu0 0.0
    %921 = vmatprep.subr.mxu0 0.0
    %922 = vmatpush2.msra.mxu0 0.0
    %923 = vmatprep.subr.mxu0 0.0
    %924 = vmatpush2.msra.mxu0 0.0
    %925 = vmatprep.subr.mxu0 0.0
    %926 = vmatpush2.msra.mxu0 0.0
    %927 = vmatprep.subr.mxu0 0.0
    %928 = vmatpush2.msra.mxu0 0.0
    %929 = vmatprep.subr.mxu0 0.0
    %930 = vmatpush2.msra.mxu0 0.0
    %931 = vmatprep.subr.mxu0 0.0
    %932 = vmatpush2.msra.mxu0 0.0
    %933 = vmatprep.mubr.f32.mxu0 0.0
    %934 = vmatmul.mubr.f32.gmra.mxu0 %v793
    %v935 = vpop.f32.mrf.mxu0
    %v936 = vadd.f32 0.0, %v935
    %v937 = vpop.f32.mrf.mxu0
    %v938 = vadd.f32 0.0, %v937
    %939 = vdwg.mxu0
    %v940 = vadd.f32 %v794, %v865
    %v941 = vadd.f32 %v795, %v867
    %v942 = vadd.f32 %v796, %v936
    %v943 = vadd.f32 %v797, %v938
    %v944 = vxor.u32 %v940, 2147483648
    %v945 = vxor.u32 %v941, 2147483648
    %v946 = vxor.u32 %v942, 2147483648
    %v947 = vmul.f32 %v944, 1.442695
    %v948 = vpow.pop %v947
    %v949 = vmul.f32 %v945, 1.442695
    %v950 = vpow.pop %v949
    %v951 = vmul.f32 %v946, 1.442695
    %v952 = vpow.pop %v951
    %v953 = vadd.f32 %v948, 1.0
    %v954 = vadd.f32 %v950, 1.0
    %v955 = vadd.f32 %v952, 1.0
    %v956 = vrcp.pop %v953
    %v957 = vmul.f32 1.0, %v956
    %v958 = vrcp.pop %v954
    %v959 = vmul.f32 1.0, %v958
    %v960 = vrcp.pop %v955
    %v961 = vmul.f32 1.0, %v960
    %v962 = vtanh.pop %v943
    %v963 = vmul.f32 %v959, %v791
    %v964 = vmul.f32 %v957, %v962
    %v965 = vadd.f32 %v963, %v964
    %v966 = vtanh.pop %v965
    %v967 = vmul.f32 %v961, %v966
    %v968 = vld [vmem:[#allocation2 + $0x60] sm:$0xff]
    %v969 = vld [vmem:[#allocation2 + $0x68] sm:$0xff]
    %v970 = vld [vmem:[#allocation2 + $0x70] sm:$0xff]
    %v971 = vld [vmem:[#allocation2 + $0x78] sm:$0xff]
    %972 = vmatprep.subr.mxu0 %v443
    %973 = vmatpush1.msra.mxu0 %v442
    %974 = vmatprep.subr.mxu0 %v439
    %975 = vmatpush1.msra.mxu0 %v438
    %976 = vmatprep.subr.mxu0 %v435
    %977 = vmatpush1.msra.mxu0 %v434
    %978 = vmatprep.subr.mxu0 %v431
    %979 = vmatpush1.msra.mxu0 %v430
    %980 = vmatprep.subr.mxu0 %v427
    %981 = vmatpush1.msra.mxu0 %v426
    %982 = vmatprep.subr.mxu0 %v423
    %983 = vmatpush1.msra.mxu0 %v422
    %984 = vmatprep.subr.mxu0 %v419
    %985 = vmatpush1.msra.mxu0 %v418
    %986 = vmatprep.subr.mxu0 %v415
    %987 = vmatpush1.msra.mxu0 %v414
    %988 = vmatprep.subr.mxu0 %v411
    %989 = vmatpush1.msra.mxu0 %v410
    %990 = vmatprep.subr.mxu0 %v407
    %991 = vmatpush1.msra.mxu0 %v406
    %992 = vmatprep.subr.mxu0 %v403
    %993 = vmatpush1.msra.mxu0 %v402
    %994 = vmatprep.subr.mxu0 %v399
    %995 = vmatpush1.msra.mxu0 %v398
    %996 = vmatprep.subr.mxu0 %v395
    %997 = vmatpush1.msra.mxu0 %v394
    %998 = vmatprep.subr.mxu0 %v391
    %999 = vmatpush1.msra.mxu0 %v390
    %1000 = vmatprep.subr.mxu0 %v387
    %1001 = vmatpush1.msra.mxu0 %v386
    %1002 = vmatprep.subr.mxu0 %v383
    %1003 = vmatpush1.msra.mxu0 %v382
    %1004 = vmatprep.subr.mxu0 0.0
    %1005 = vmatpush2.msra.mxu0 0.0
    %1006 = vmatprep.subr.mxu0 0.0
    %1007 = vmatpush2.msra.mxu0 0.0
    %1008 = vmatprep.subr.mxu0 0.0
    %1009 = vmatpush2.msra.mxu0 0.0
    %1010 = vmatprep.subr.mxu0 0.0
    %1011 = vmatpush2.msra.mxu0 0.0
    %1012 = vmatprep.subr.mxu0 0.0
    %1013 = vmatpush2.msra.mxu0 0.0
    %1014 = vmatprep.subr.mxu0 0.0
    %1015 = vmatpush2.msra.mxu0 0.0
    %1016 = vmatprep.subr.mxu0 0.0
    %1017 = vmatpush2.msra.mxu0 0.0
    %1018 = vmatprep.subr.mxu0 0.0
    %1019 = vmatpush2.msra.mxu0 0.0
    %1020 = vmatprep.subr.mxu0 0.0
    %1021 = vmatpush2.msra.mxu0 0.0
    %1022 = vmatprep.subr.mxu0 0.0
    %1023 = vmatpush2.msra.mxu0 0.0
    %1024 = vmatprep.subr.mxu0 0.0
    %1025 = vmatpush2.msra.mxu0 0.0
    %1026 = vmatprep.subr.mxu0 0.0
    %1027 = vmatpush2.msra.mxu0 0.0
    %1028 = vmatprep.subr.mxu0 0.0
    %1029 = vmatpush2.msra.mxu0 0.0
    %1030 = vmatprep.subr.mxu0 0.0
    %1031 = vmatpush2.msra.mxu0 0.0
    %1032 = vmatprep.subr.mxu0 0.0
    %1033 = vmatpush2.msra.mxu0 0.0
    %1034 = vmatprep.subr.mxu0 0.0
    %1035 = vmatpush2.msra.mxu0 0.0
    %1036 = vmatprep.mubr.f32.mxu0 0.0
    %1037 = vmatmul.mubr.f32.gmra.mxu0 %v967
    %v1038 = vpop.f32.mrf.mxu0
    %v1039 = vadd.f32 0.0, %v1038
    %v1040 = vpop.f32.mrf.mxu0
    %v1041 = vadd.f32 0.0, %v1040
    %1042 = vdwg.mxu0
    %1043 = vmatprep.subr.mxu0 %v445
    %1044 = vmatpush1.msra.mxu0 %v444
    %1045 = vmatprep.subr.mxu0 %v441
    %1046 = vmatpush1.msra.mxu0 %v440
    %1047 = vmatprep.subr.mxu0 %v437
    %1048 = vmatpush1.msra.mxu0 %v436
    %1049 = vmatprep.subr.mxu0 %v433
    %1050 = vmatpush1.msra.mxu0 %v432
    %1051 = vmatprep.subr.mxu0 %v429
    %1052 = vmatpush1.msra.mxu0 %v428
    %1053 = vmatprep.subr.mxu0 %v425
    %1054 = vmatpush1.msra.mxu0 %v424
    %1055 = vmatprep.subr.mxu0 %v421
    %1056 = vmatpush1.msra.mxu0 %v420
    %1057 = vmatprep.subr.mxu0 %v417
    %1058 = vmatpush1.msra.mxu0 %v416
    %1059 = vmatprep.subr.mxu0 %v413
    %1060 = vmatpush1.msra.mxu0 %v412
    %1061 = vmatprep.subr.mxu0 %v409
    %1062 = vmatpush1.msra.mxu0 %v408
    %1063 = vmatprep.subr.mxu0 %v405
    %1064 = vmatpush1.msra.mxu0 %v404
    %1065 = vmatprep.subr.mxu0 %v401
    %1066 = vmatpush1.msra.mxu0 %v400
    %1067 = vmatprep.subr.mxu0 %v397
    %1068 = vmatpush1.msra.mxu0 %v396
    %1069 = vmatprep.subr.mxu0 %v393
    %1070 = vmatpush1.msra.mxu0 %v392
    %1071 = vmatprep.subr.mxu0 %v389
    %1072 = vmatpush1.msra.mxu0 %v388
    %1073 = vmatprep.subr.mxu0 %v385
    %1074 = vmatpush1.msra.mxu0 %v384
    %1075 = vmatprep.subr.mxu0 0.0
    %1076 = vmatpush2.msra.mxu0 0.0
    %1077 = vmatprep.subr.mxu0 0.0
    %1078 = vmatpush2.msra.mxu0 0.0
    %1079 = vmatprep.subr.mxu0 0.0
    %1080 = vmatpush2.msra.mxu0 0.0
    %1081 = vmatprep.subr.mxu0 0.0
    %1082 = vmatpush2.msra.mxu0 0.0
    %1083 = vmatprep.subr.mxu0 0.0
    %1084 = vmatpush2.msra.mxu0 0.0
    %1085 = vmatprep.subr.mxu0 0.0
    %1086 = vmatpush2.msra.mxu0 0.0
    %1087 = vmatprep.subr.mxu0 0.0
    %1088 = vmatpush2.msra.mxu0 0.0
    %1089 = vmatprep.subr.mxu0 0.0
    %1090 = vmatpush2.msra.mxu0 0.0
    %1091 = vmatprep.subr.mxu0 0.0
    %1092 = vmatpush2.msra.mxu0 0.0
    %1093 = vmatprep.subr.mxu0 0.0
    %1094 = vmatpush2.msra.mxu0 0.0
    %1095 = vmatprep.subr.mxu0 0.0
    %1096 = vmatpush2.msra.mxu0 0.0
    %1097 = vmatprep.subr.mxu0 0.0
    %1098 = vmatpush2.msra.mxu0 0.0
    %1099 = vmatprep.subr.mxu0 0.0
    %1100 = vmatpush2.msra.mxu0 0.0
    %1101 = vmatprep.subr.mxu0 0.0
    %1102 = vmatpush2.msra.mxu0 0.0
    %1103 = vmatprep.subr.mxu0 0.0
    %1104 = vmatpush2.msra.mxu0 0.0
    %1105 = vmatprep.subr.mxu0 0.0
    %1106 = vmatpush2.msra.mxu0 0.0
    %1107 = vmatprep.mubr.f32.mxu0 0.0
    %1108 = vmatmul.mubr.f32.gmra.mxu0 %v967
    %v1109 = vpop.f32.mrf.mxu0
    %v1110 = vadd.f32 0.0, %v1109
    %v1111 = vpop.f32.mrf.mxu0
    %v1112 = vadd.f32 0.0, %v1111
    %1113 = vdwg.mxu0
    %v1114 = vadd.f32 %v968, %v1039
    %v1115 = vadd.f32 %v969, %v1041
    %v1116 = vadd.f32 %v970, %v1110
    %v1117 = vadd.f32 %v971, %v1112
    %v1118 = vxor.u32 %v1114, 2147483648
    %v1119 = vxor.u32 %v1115, 2147483648
    %v1120 = vxor.u32 %v1116, 2147483648
    %v1121 = vmul.f32 %v1118, 1.442695
    %v1122 = vpow.pop %v1121
    %v1123 = vmul.f32 %v1119, 1.442695
    %v1124 = vpow.pop %v1123
    %v1125 = vmul.f32 %v1120, 1.442695
    %v1126 = vpow.pop %v1125
    %v1127 = vadd.f32 %v1122, 1.0
    %v1128 = vadd.f32 %v1124, 1.0
    %v1129 = vadd.f32 %v1126, 1.0
    %v1130 = vrcp.pop %v1127
    %v1131 = vmul.f32 1.0, %v1130
    %v1132 = vrcp.pop %v1128
    %v1133 = vmul.f32 1.0, %v1132
    %v1134 = vrcp.pop %v1129
    %v1135 = vmul.f32 1.0, %v1134
    %v1136 = vtanh.pop %v1117
    %v1137 = vmul.f32 %v1133, %v965
    %v1138 = vmul.f32 %v1131, %v1136
    %v1139 = vadd.f32 %v1137, %v1138
    %v1140 = vtanh.pop %v1139
    %v1141 = vmul.f32 %v1135, %v1140
    %v1142 = vld [vmem:[#allocation2 + $0x80] sm:$0xff]
    %v1143 = vld [vmem:[#allocation2 + $0x88] sm:$0xff]
    %v1144 = vld [vmem:[#allocation2 + $0x90] sm:$0xff]
    %v1145 = vld [vmem:[#allocation2 + $0x98] sm:$0xff]
    %1146 = vmatprep.subr.mxu0 %v443
    %1147 = vmatpush1.msra.mxu0 %v442
    %1148 = vmatprep.subr.mxu0 %v439
    %1149 = vmatpush1.msra.mxu0 %v438
    %1150 = vmatprep.subr.mxu0 %v435
    %1151 = vmatpush1.msra.mxu0 %v434
    %1152 = vmatprep.subr.mxu0 %v431
    %1153 = vmatpush1.msra.mxu0 %v430
    %1154 = vmatprep.subr.mxu0 %v427
    %1155 = vmatpush1.msra.mxu0 %v426
    %1156 = vmatprep.subr.mxu0 %v423
    %1157 = vmatpush1.msra.mxu0 %v422
    %1158 = vmatprep.subr.mxu0 %v419
    %1159 = vmatpush1.msra.mxu0 %v418
    %1160 = vmatprep.subr.mxu0 %v415
    %1161 = vmatpush1.msra.mxu0 %v414
    %1162 = vmatprep.subr.mxu0 %v411
    %1163 = vmatpush1.msra.mxu0 %v410
    %1164 = vmatprep.subr.mxu0 %v407
    %1165 = vmatpush1.msra.mxu0 %v406
    %1166 = vmatprep.subr.mxu0 %v403
    %1167 = vmatpush1.msra.mxu0 %v402
    %1168 = vmatprep.subr.mxu0 %v399
    %1169 = vmatpush1.msra.mxu0 %v398
    %1170 = vmatprep.subr.mxu0 %v395
    %1171 = vmatpush1.msra.mxu0 %v394
    %1172 = vmatprep.subr.mxu0 %v391
    %1173 = vmatpush1.msra.mxu0 %v390
    %1174 = vmatprep.subr.mxu0 %v387
    %1175 = vmatpush1.msra.mxu0 %v386
    %1176 = vmatprep.subr.mxu0 %v383
    %1177 = vmatpush1.msra.mxu0 %v382
    %1178 = vmatprep.subr.mxu0 0.0
    %1179 = vmatpush2.msra.mxu0 0.0
    %1180 = vmatprep.subr.mxu0 0.0
    %1181 = vmatpush2.msra.mxu0 0.0
    %1182 = vmatprep.subr.mxu0 0.0
    %1183 = vmatpush2.msra.mxu0 0.0
    %1184 = vmatprep.subr.mxu0 0.0
    %1185 = vmatpush2.msra.mxu0 0.0
    %1186 = vmatprep.subr.mxu0 0.0
    %1187 = vmatpush2.msra.mxu0 0.0
    %1188 = vmatprep.subr.mxu0 0.0
    %1189 = vmatpush2.msra.mxu0 0.0
    %1190 = vmatprep.subr.mxu0 0.0
    %1191 = vmatpush2.msra.mxu0 0.0
    %1192 = vmatprep.subr.mxu0 0.0
    %1193 = vmatpush2.msra.mxu0 0.0
    %1194 = vmatprep.subr.mxu0 0.0
    %1195 = vmatpush2.msra.mxu0 0.0
    %1196 = vmatprep.subr.mxu0 0.0
    %1197 = vmatpush2.msra.mxu0 0.0
    %1198 = vmatprep.subr.mxu0 0.0
    %1199 = vmatpush2.msra.mxu0 0.0
    %1200 = vmatprep.subr.mxu0 0.0
    %1201 = vmatpush2.msra.mxu0 0.0
    %1202 = vmatprep.subr.mxu0 0.0
    %1203 = vmatpush2.msra.mxu0 0.0
    %1204 = vmatprep.subr.mxu0 0.0
    %1205 = vmatpush2.msra.mxu0 0.0
    %1206 = vmatprep.subr.mxu0 0.0
    %1207 = vmatpush2.msra.mxu0 0.0
    %1208 = vmatprep.subr.mxu0 0.0
    %1209 = vmatpush2.msra.mxu0 0.0
    %1210 = vmatprep.mubr.f32.mxu0 0.0
    %1211 = vmatmul.mubr.f32.gmra.mxu0 %v1141
    %v1212 = vpop.f32.mrf.mxu0
    %v1213 = vadd.f32 0.0, %v1212
    %v1214 = vpop.f32.mrf.mxu0
    %v1215 = vadd.f32 0.0, %v1214
    %1216 = vdwg.mxu0
    %1217 = vmatprep.subr.mxu0 %v445
    %1218 = vmatpush1.msra.mxu0 %v444
    %1219 = vmatprep.subr.mxu0 %v441
    %1220 = vmatpush1.msra.mxu0 %v440
    %1221 = vmatprep.subr.mxu0 %v437
    %1222 = vmatpush1.msra.mxu0 %v436
    %1223 = vmatprep.subr.mxu0 %v433
    %1224 = vmatpush1.msra.mxu0 %v432
    %1225 = vmatprep.subr.mxu0 %v429
    %1226 = vmatpush1.msra.mxu0 %v428
    %1227 = vmatprep.subr.mxu0 %v425
    %1228 = vmatpush1.msra.mxu0 %v424
    %1229 = vmatprep.subr.mxu0 %v421
    %1230 = vmatpush1.msra.mxu0 %v420
    %1231 = vmatprep.subr.mxu0 %v417
    %1232 = vmatpush1.msra.mxu0 %v416
    %1233 = vmatprep.subr.mxu0 %v413
    %1234 = vmatpush1.msra.mxu0 %v412
    %1235 = vmatprep.subr.mxu0 %v409
    %1236 = vmatpush1.msra.mxu0 %v408
    %1237 = vmatprep.subr.mxu0 %v405
    %1238 = vmatpush1.msra.mxu0 %v404
    %1239 = vmatprep.subr.mxu0 %v401
    %1240 = vmatpush1.msra.mxu0 %v400
    %1241 = vmatprep.subr.mxu0 %v397
    %1242 = vmatpush1.msra.mxu0 %v396
    %1243 = vmatprep.subr.mxu0 %v393
    %1244 = vmatpush1.msra.mxu0 %v392
    %1245 = vmatprep.subr.mxu0 %v389
    %1246 = vmatpush1.msra.mxu0 %v388
    %1247 = vmatprep.subr.mxu0 %v385
    %1248 = vmatpush1.msra.mxu0 %v384
    %1249 = vmatprep.subr.mxu0 0.0
    %1250 = vmatpush2.msra.mxu0 0.0
    %1251 = vmatprep.subr.mxu0 0.0
    %1252 = vmatpush2.msra.mxu0 0.0
    %1253 = vmatprep.subr.mxu0 0.0
    %1254 = vmatpush2.msra.mxu0 0.0
    %1255 = vmatprep.subr.mxu0 0.0
    %1256 = vmatpush2.msra.mxu0 0.0
    %1257 = vmatprep.subr.mxu0 0.0
    %1258 = vmatpush2.msra.mxu0 0.0
    %1259 = vmatprep.subr.mxu0 0.0
    %1260 = vmatpush2.msra.mxu0 0.0
    %1261 = vmatprep.subr.mxu0 0.0
    %1262 = vmatpush2.msra.mxu0 0.0
    %1263 = vmatprep.subr.mxu0 0.0
    %1264 = vmatpush2.msra.mxu0 0.0
    %1265 = vmatprep.subr.mxu0 0.0
    %1266 = vmatpush2.msra.mxu0 0.0
    %1267 = vmatprep.subr.mxu0 0.0
    %1268 = vmatpush2.msra.mxu0 0.0
    %1269 = vmatprep.subr.mxu0 0.0
    %1270 = vmatpush2.msra.mxu0 0.0
    %1271 = vmatprep.subr.mxu0 0.0
    %1272 = vmatpush2.msra.mxu0 0.0
    %1273 = vmatprep.subr.mxu0 0.0
    %1274 = vmatpush2.msra.mxu0 0.0
    %1275 = vmatprep.subr.mxu0 0.0
    %1276 = vmatpush2.msra.mxu0 0.0
    %1277 = vmatprep.subr.mxu0 0.0
    %1278 = vmatpush2.msra.mxu0 0.0
    %1279 = vmatprep.subr.mxu0 0.0
    %1280 = vmatpush2.msra.mxu0 0.0
    %1281 = vmatprep.mubr.f32.mxu0 0.0
    %1282 = vmatmul.mubr.f32.gmra.mxu0 %v1141
    %v1283 = vpop.f32.mrf.mxu0
    %v1284 = vadd.f32 0.0, %v1283
    %v1285 = vpop.f32.mrf.mxu0
    %v1286 = vadd.f32 0.0, %v1285
    %1287 = vdwg.mxu0
    %v1288 = vadd.f32 %v1142, %v1213
    %v1289 = vadd.f32 %v1143, %v1215
    %v1290 = vadd.f32 %v1144, %v1284
    %v1291 = vadd.f32 %v1145, %v1286
    %v1292 = vxor.u32 %v1288, 2147483648
    %v1293 = vxor.u32 %v1289, 2147483648
    %v1294 = vxor.u32 %v1290, 2147483648
    %v1295 = vmul.f32 %v1292, 1.442695
    %v1296 = vpow.pop %v1295
    %v1297 = vmul.f32 %v1293, 1.442695
    %v1298 = vpow.pop %v1297
    %v1299 = vmul.f32 %v1294, 1.442695
    %v1300 = vpow.pop %v1299
    %v1301 = vadd.f32 %v1296, 1.0
    %v1302 = vadd.f32 %v1298, 1.0
    %v1303 = vadd.f32 %v1300, 1.0
    %v1304 = vrcp.pop %v1301
    %v1305 = vmul.f32 1.0, %v1304
    %v1306 = vrcp.pop %v1302
    %v1307 = vmul.f32 1.0, %v1306
    %v1308 = vrcp.pop %v1303
    %v1309 = vmul.f32 1.0, %v1308
    %v1310 = vtanh.pop %v1291
    %v1311 = vmul.f32 %v1307, %v1139
    %v1312 = vmul.f32 %v1305, %v1310
    %v1313 = vadd.f32 %v1311, %v1312
    %v1314 = vtanh.pop %v1313
    %v1315 = vmul.f32 %v1309, %v1314
    %v1316 = vld [vmem:[#allocation2 + $0xa0] sm:$0xff]
    %v1317 = vld [vmem:[#allocation2 + $0xa8] sm:$0xff]
    %v1318 = vld [vmem:[#allocation2 + $0xb0] sm:$0xff]
    %v1319 = vld [vmem:[#allocation2 + $0xb8] sm:$0xff]
    %1320 = vmatprep.subr.mxu0 %v443
    %1321 = vmatpush1.msra.mxu0 %v442
    %1322 = vmatprep.subr.mxu0 %v439
    %1323 = vmatpush1.msra.mxu0 %v438
    %1324 = vmatprep.subr.mxu0 %v435
    %1325 = vmatpush1.msra.mxu0 %v434
    %1326 = vmatprep.subr.mxu0 %v431
    %1327 = vmatpush1.msra.mxu0 %v430
    %1328 = vmatprep.subr.mxu0 %v427
    %1329 = vmatpush1.msra.mxu0 %v426
    %1330 = vmatprep.subr.mxu0 %v423
    %1331 = vmatpush1.msra.mxu0 %v422
    %1332 = vmatprep.subr.mxu0 %v419
    %1333 = vmatpush1.msra.mxu0 %v418
    %1334 = vmatprep.subr.mxu0 %v415
    %1335 = vmatpush1.msra.mxu0 %v414
    %1336 = vmatprep.subr.mxu0 %v411
    %1337 = vmatpush1.msra.mxu0 %v410
    %1338 = vmatprep.subr.mxu0 %v407
    %1339 = vmatpush1.msra.mxu0 %v406
    %1340 = vmatprep.subr.mxu0 %v403
    %1341 = vmatpush1.msra.mxu0 %v402
    %1342 = vmatprep.subr.mxu0 %v399
    %1343 = vmatpush1.msra.mxu0 %v398
    %1344 = vmatprep.subr.mxu0 %v395
    %1345 = vmatpush1.msra.mxu0 %v394
    %1346 = vmatprep.subr.mxu0 %v391
    %1347 = vmatpush1.msra.mxu0 %v390
    %1348 = vmatprep.subr.mxu0 %v387
    %1349 = vmatpush1.msra.mxu0 %v386
    %1350 = vmatprep.subr.mxu0 %v383
    %1351 = vmatpush1.msra.mxu0 %v382
    %1352 = vmatprep.subr.mxu0 0.0
    %1353 = vmatpush2.msra.mxu0 0.0
    %1354 = vmatprep.subr.mxu0 0.0
    %1355 = vmatpush2.msra.mxu0 0.0
    %1356 = vmatprep.subr.mxu0 0.0
    %1357 = vmatpush2.msra.mxu0 0.0
    %1358 = vmatprep.subr.mxu0 0.0
    %1359 = vmatpush2.msra.mxu0 0.0
    %1360 = vmatprep.subr.mxu0 0.0
    %1361 = vmatpush2.msra.mxu0 0.0
    %1362 = vmatprep.subr.mxu0 0.0
    %1363 = vmatpush2.msra.mxu0 0.0
    %1364 = vmatprep.subr.mxu0 0.0
    %1365 = vmatpush2.msra.mxu0 0.0
    %1366 = vmatprep.subr.mxu0 0.0
    %1367 = vmatpush2.msra.mxu0 0.0
    %1368 = vmatprep.subr.mxu0 0.0
    %1369 = vmatpush2.msra.mxu0 0.0
    %1370 = vmatprep.subr.mxu0 0.0
    %1371 = vmatpush2.msra.mxu0 0.0
    %1372 = vmatprep.subr.mxu0 0.0
    %1373 = vmatpush2.msra.mxu0 0.0
    %1374 = vmatprep.subr.mxu0 0.0
    %1375 = vmatpush2.msra.mxu0 0.0
    %1376 = vmatprep.subr.mxu0 0.0
    %1377 = vmatpush2.msra.mxu0 0.0
    %1378 = vmatprep.subr.mxu0 0.0
    %1379 = vmatpush2.msra.mxu0 0.0
    %1380 = vmatprep.subr.mxu0 0.0
    %1381 = vmatpush2.msra.mxu0 0.0
    %1382 = vmatprep.subr.mxu0 0.0
    %1383 = vmatpush2.msra.mxu0 0.0
    %1384 = vmatprep.mubr.f32.mxu0 0.0
    %1385 = vmatmul.mubr.f32.gmra.mxu0 %v1315
    %v1386 = vpop.f32.mrf.mxu0
    %v1387 = vadd.f32 0.0, %v1386
    %v1388 = vpop.f32.mrf.mxu0
    %v1389 = vadd.f32 0.0, %v1388
    %1390 = vdwg.mxu0
    %1391 = vmatprep.subr.mxu0 %v445
    %1392 = vmatpush1.msra.mxu0 %v444
    %1393 = vmatprep.subr.mxu0 %v441
    %1394 = vmatpush1.msra.mxu0 %v440
    %1395 = vmatprep.subr.mxu0 %v437
    %1396 = vmatpush1.msra.mxu0 %v436
    %1397 = vmatprep.subr.mxu0 %v433
    %1398 = vmatpush1.msra.mxu0 %v432
    %1399 = vmatprep.subr.mxu0 %v429
    %1400 = vmatpush1.msra.mxu0 %v428
    %1401 = vmatprep.subr.mxu0 %v425
    %1402 = vmatpush1.msra.mxu0 %v424
    %1403 = vmatprep.subr.mxu0 %v421
    %1404 = vmatpush1.msra.mxu0 %v420
    %1405 = vmatprep.subr.mxu0 %v417
    %1406 = vmatpush1.msra.mxu0 %v416
    %1407 = vmatprep.subr.mxu0 %v413
    %1408 = vmatpush1.msra.mxu0 %v412
    %1409 = vmatprep.subr.mxu0 %v409
    %1410 = vmatpush1.msra.mxu0 %v408
    %1411 = vmatprep.subr.mxu0 %v405
    %1412 = vmatpush1.msra.mxu0 %v404
    %1413 = vmatprep.subr.mxu0 %v401
    %1414 = vmatpush1.msra.mxu0 %v400
    %1415 = vmatprep.subr.mxu0 %v397
    %1416 = vmatpush1.msra.mxu0 %v396
    %1417 = vmatprep.subr.mxu0 %v393
    %1418 = vmatpush1.msra.mxu0 %v392
    %1419 = vmatprep.subr.mxu0 %v389
    %1420 = vmatpush1.msra.mxu0 %v388
    %1421 = vmatprep.subr.mxu0 %v385
    %1422 = vmatpush1.msra.mxu0 %v384
    %1423 = vmatprep.subr.mxu0 0.0
    %1424 = vmatpush2.msra.mxu0 0.0
    %1425 = vmatprep.subr.mxu0 0.0
    %1426 = vmatpush2.msra.mxu0 0.0
    %1427 = vmatprep.subr.mxu0 0.0
    %1428 = vmatpush2.msra.mxu0 0.0
    %1429 = vmatprep.subr.mxu0 0.0
    %1430 = vmatpush2.msra.mxu0 0.0
    %1431 = vmatprep.subr.mxu0 0.0
    %1432 = vmatpush2.msra.mxu0 0.0
    %1433 = vmatprep.subr.mxu0 0.0
    %1434 = vmatpush2.msra.mxu0 0.0
    %1435 = vmatprep.subr.mxu0 0.0
    %1436 = vmatpush2.msra.mxu0 0.0
    %1437 = vmatprep.subr.mxu0 0.0
    %1438 = vmatpush2.msra.mxu0 0.0
    %1439 = vmatprep.subr.mxu0 0.0
    %1440 = vmatpush2.msra.mxu0 0.0
    %1441 = vmatprep.subr.mxu0 0.0
    %1442 = vmatpush2.msra.mxu0 0.0
    %1443 = vmatprep.subr.mxu0 0.0
    %1444 = vmatpush2.msra.mxu0 0.0
    %1445 = vmatprep.subr.mxu0 0.0
    %1446 = vmatpush2.msra.mxu0 0.0
    %1447 = vmatprep.subr.mxu0 0.0
    %1448 = vmatpush2.msra.mxu0 0.0
    %1449 = vmatprep.subr.mxu0 0.0
    %1450 = vmatpush2.msra.mxu0 0.0
    %1451 = vmatprep.subr.mxu0 0.0
    %1452 = vmatpush2.msra.mxu0 0.0
    %1453 = vmatprep.subr.mxu0 0.0
    %1454 = vmatpush2.msra.mxu0 0.0
    %1455 = vmatprep.mubr.f32.mxu0 0.0
    %1456 = vmatmul.mubr.f32.gmra.mxu0 %v1315
    %v1457 = vpop.f32.mrf.mxu0
    %v1458 = vadd.f32 0.0, %v1457
    %v1459 = vpop.f32.mrf.mxu0
    %v1460 = vadd.f32 0.0, %v1459
    %1461 = vdwg.mxu0
    %v1462 = vadd.f32 %v1316, %v1387
    %v1463 = vadd.f32 %v1317, %v1389
    %v1464 = vadd.f32 %v1318, %v1458
    %v1465 = vadd.f32 %v1319, %v1460
    %v1466 = vxor.u32 %v1462, 2147483648
    %v1467 = vxor.u32 %v1463, 2147483648
    %v1468 = vxor.u32 %v1464, 2147483648
    %v1469 = vmul.f32 %v1466, 1.442695
    %v1470 = vpow.pop %v1469
    %v1471 = vmul.f32 %v1467, 1.442695
    %v1472 = vpow.pop %v1471
    %v1473 = vmul.f32 %v1468, 1.442695
    %v1474 = vpow.pop %v1473
    %v1475 = vadd.f32 %v1470, 1.0
    %v1476 = vadd.f32 %v1472, 1.0
    %v1477 = vadd.f32 %v1474, 1.0
    %v1478 = vrcp.pop %v1475
    %v1479 = vmul.f32 1.0, %v1478
    %v1480 = vrcp.pop %v1476
    %v1481 = vmul.f32 1.0, %v1480
    %v1482 = vrcp.pop %v1477
    %v1483 = vmul.f32 1.0, %v1482
    %v1484 = vtanh.pop %v1465
    %v1485 = vmul.f32 %v1481, %v1313
    %v1486 = vmul.f32 %v1479, %v1484
    %v1487 = vadd.f32 %v1485, %v1486
    %v1488 = vtanh.pop %v1487
    %v1489 = vmul.f32 %v1483, %v1488
    %v1490 = vld [vmem:[#allocation2 + $0xc0] sm:$0xff]
    %v1491 = vld [vmem:[#allocation2 + $0xc8] sm:$0xff]
    %v1492 = vld [vmem:[#allocation2 + $0xd0] sm:$0xff]
    %v1493 = vld [vmem:[#allocation2 + $0xd8] sm:$0xff]
    %1494 = vmatprep.subr.mxu0 %v443
    %1495 = vmatpush1.msra.mxu0 %v442
    %1496 = vmatprep.subr.mxu0 %v439
    %1497 = vmatpush1.msra.mxu0 %v438
    %1498 = vmatprep.subr.mxu0 %v435
    %1499 = vmatpush1.msra.mxu0 %v434
    %1500 = vmatprep.subr.mxu0 %v431
    %1501 = vmatpush1.msra.mxu0 %v430
    %1502 = vmatprep.subr.mxu0 %v427
    %1503 = vmatpush1.msra.mxu0 %v426
    %1504 = vmatprep.subr.mxu0 %v423
    %1505 = vmatpush1.msra.mxu0 %v422
    %1506 = vmatprep.subr.mxu0 %v419
    %1507 = vmatpush1.msra.mxu0 %v418
    %1508 = vmatprep.subr.mxu0 %v415
    %1509 = vmatpush1.msra.mxu0 %v414
    %1510 = vmatprep.subr.mxu0 %v411
    %1511 = vmatpush1.msra.mxu0 %v410
    %1512 = vmatprep.subr.mxu0 %v407
    %1513 = vmatpush1.msra.mxu0 %v406
    %1514 = vmatprep.subr.mxu0 %v403
    %1515 = vmatpush1.msra.mxu0 %v402
    %1516 = vmatprep.subr.mxu0 %v399
    %1517 = vmatpush1.msra.mxu0 %v398
    %1518 = vmatprep.subr.mxu0 %v395
    %1519 = vmatpush1.msra.mxu0 %v394
    %1520 = vmatprep.subr.mxu0 %v391
    %1521 = vmatpush1.msra.mxu0 %v390
    %1522 = vmatprep.subr.mxu0 %v387
    %1523 = vmatpush1.msra.mxu0 %v386
    %1524 = vmatprep.subr.mxu0 %v383
    %1525 = vmatpush1.msra.mxu0 %v382
    %1526 = vmatprep.subr.mxu0 0.0
    %1527 = vmatpush2.msra.mxu0 0.0
    %1528 = vmatprep.subr.mxu0 0.0
    %1529 = vmatpush2.msra.mxu0 0.0
    %1530 = vmatprep.subr.mxu0 0.0
    %1531 = vmatpush2.msra.mxu0 0.0
    %1532 = vmatprep.subr.mxu0 0.0
    %1533 = vmatpush2.msra.mxu0 0.0
    %1534 = vmatprep.subr.mxu0 0.0
    %1535 = vmatpush2.msra.mxu0 0.0
    %1536 = vmatprep.subr.mxu0 0.0
    %1537 = vmatpush2.msra.mxu0 0.0
    %1538 = vmatprep.subr.mxu0 0.0
    %1539 = vmatpush2.msra.mxu0 0.0
    %1540 = vmatprep.subr.mxu0 0.0
    %1541 = vmatpush2.msra.mxu0 0.0
    %1542 = vmatprep.subr.mxu0 0.0
    %1543 = vmatpush2.msra.mxu0 0.0
    %1544 = vmatprep.subr.mxu0 0.0
    %1545 = vmatpush2.msra.mxu0 0.0
    %1546 = vmatprep.subr.mxu0 0.0
    %1547 = vmatpush2.msra.mxu0 0.0
    %1548 = vmatprep.subr.mxu0 0.0
    %1549 = vmatpush2.msra.mxu0 0.0
    %1550 = vmatprep.subr.mxu0 0.0
    %1551 = vmatpush2.msra.mxu0 0.0
    %1552 = vmatprep.subr.mxu0 0.0
    %1553 = vmatpush2.msra.mxu0 0.0
    %1554 = vmatprep.subr.mxu0 0.0
    %1555 = vmatpush2.msra.mxu0 0.0
    %1556 = vmatprep.subr.mxu0 0.0
    %1557 = vmatpush2.msra.mxu0 0.0
    %1558 = vmatprep.mubr.f32.mxu0 0.0
    %1559 = vmatmul.mubr.f32.gmra.mxu0 %v1489
    %v1560 = vpop.f32.mrf.mxu0
    %v1561 = vadd.f32 0.0, %v1560
    %v1562 = vpop.f32.mrf.mxu0
    %v1563 = vadd.f32 0.0, %v1562
    %1564 = vdwg.mxu0
    %1565 = vmatprep.subr.mxu0 %v445
    %1566 = vmatpush1.msra.mxu0 %v444
    %1567 = vmatprep.subr.mxu0 %v441
    %1568 = vmatpush1.msra.mxu0 %v440
    %1569 = vmatprep.subr.mxu0 %v437
    %1570 = vmatpush1.msra.mxu0 %v436
    %1571 = vmatprep.subr.mxu0 %v433
    %1572 = vmatpush1.msra.mxu0 %v432
    %1573 = vmatprep.subr.mxu0 %v429
    %1574 = vmatpush1.msra.mxu0 %v428
    %1575 = vmatprep.subr.mxu0 %v425
    %1576 = vmatpush1.msra.mxu0 %v424
    %1577 = vmatprep.subr.mxu0 %v421
    %1578 = vmatpush1.msra.mxu0 %v420
    %1579 = vmatprep.subr.mxu0 %v417
    %1580 = vmatpush1.msra.mxu0 %v416
    %1581 = vmatprep.subr.mxu0 %v413
    %1582 = vmatpush1.msra.mxu0 %v412
    %1583 = vmatprep.subr.mxu0 %v409
    %1584 = vmatpush1.msra.mxu0 %v408
    %1585 = vmatprep.subr.mxu0 %v405
    %1586 = vmatpush1.msra.mxu0 %v404
    %1587 = vmatprep.subr.mxu0 %v401
    %1588 = vmatpush1.msra.mxu0 %v400
    %1589 = vmatprep.subr.mxu0 %v397
    %1590 = vmatpush1.msra.mxu0 %v396
    %1591 = vmatprep.subr.mxu0 %v393
    %1592 = vmatpush1.msra.mxu0 %v392
    %1593 = vmatprep.subr.mxu0 %v389
    %1594 = vmatpush1.msra.mxu0 %v388
    %1595 = vmatprep.subr.mxu0 %v385
    %1596 = vmatpush1.msra.mxu0 %v384
    %1597 = vmatprep.subr.mxu0 0.0
    %1598 = vmatpush2.msra.mxu0 0.0
    %1599 = vmatprep.subr.mxu0 0.0
    %1600 = vmatpush2.msra.mxu0 0.0
    %1601 = vmatprep.subr.mxu0 0.0
    %1602 = vmatpush2.msra.mxu0 0.0
    %1603 = vmatprep.subr.mxu0 0.0
    %1604 = vmatpush2.msra.mxu0 0.0
    %1605 = vmatprep.subr.mxu0 0.0
    %1606 = vmatpush2.msra.mxu0 0.0
    %1607 = vmatprep.subr.mxu0 0.0
    %1608 = vmatpush2.msra.mxu0 0.0
    %1609 = vmatprep.subr.mxu0 0.0
    %1610 = vmatpush2.msra.mxu0 0.0
    %1611 = vmatprep.subr.mxu0 0.0
    %1612 = vmatpush2.msra.mxu0 0.0
    %1613 = vmatprep.subr.mxu0 0.0
    %1614 = vmatpush2.msra.mxu0 0.0
    %1615 = vmatprep.subr.mxu0 0.0
    %1616 = vmatpush2.msra.mxu0 0.0
    %1617 = vmatprep.subr.mxu0 0.0
    %1618 = vmatpush2.msra.mxu0 0.0
    %1619 = vmatprep.subr.mxu0 0.0
    %1620 = vmatpush2.msra.mxu0 0.0
    %1621 = vmatprep.subr.mxu0 0.0
    %1622 = vmatpush2.msra.mxu0 0.0
    %1623 = vmatprep.subr.mxu0 0.0
    %1624 = vmatpush2.msra.mxu0 0.0
    %1625 = vmatprep.subr.mxu0 0.0
    %1626 = vmatpush2.msra.mxu0 0.0
    %1627 = vmatprep.subr.mxu0 0.0
    %1628 = vmatpush2.msra.mxu0 0.0
    %1629 = vmatprep.mubr.f32.mxu0 0.0
    %1630 = vmatmul.mubr.f32.gmra.mxu0 %v1489
    %v1631 = vpop.f32.mrf.mxu0
    %v1632 = vadd.f32 0.0, %v1631
    %v1633 = vpop.f32.mrf.mxu0
    %v1634 = vadd.f32 0.0, %v1633
    %1635 = vdwg.mxu0
    %v1636 = vadd.f32 %v1490, %v1561
    %v1637 = vadd.f32 %v1491, %v1563
    %v1638 = vadd.f32 %v1492, %v1632
    %v1639 = vadd.f32 %v1493, %v1634
    %v1640 = vxor.u32 %v1636, 2147483648
    %v1641 = vxor.u32 %v1637, 2147483648
    %v1642 = vxor.u32 %v1638, 2147483648
    %v1643 = vmul.f32 %v1640, 1.442695
    %v1644 = vpow.pop %v1643
    %v1645 = vmul.f32 %v1641, 1.442695
    %v1646 = vpow.pop %v1645
    %v1647 = vmul.f32 %v1642, 1.442695
    %v1648 = vpow.pop %v1647
    %v1649 = vadd.f32 %v1644, 1.0
    %v1650 = vadd.f32 %v1646, 1.0
    %v1651 = vadd.f32 %v1648, 1.0
    %v1652 = vrcp.pop %v1649
    %v1653 = vmul.f32 1.0, %v1652
    %v1654 = vrcp.pop %v1650
    %v1655 = vmul.f32 1.0, %v1654
    %v1656 = vrcp.pop %v1651
    %v1657 = vmul.f32 1.0, %v1656
    %v1658 = vtanh.pop %v1639
    %v1659 = vmul.f32 %v1655, %v1487
    %v1660 = vmul.f32 %v1653, %v1658
    %v1661 = vadd.f32 %v1659, %v1660
    %v1662 = vtanh.pop %v1661
    %v1663 = vmul.f32 %v1657, %v1662
    %v1664 = vld [vmem:[#allocation2 + $0xe0] sm:$0xff]
    %v1665 = vld [vmem:[#allocation2 + $0xe8] sm:$0xff]
    %v1666 = vld [vmem:[#allocation2 + $0xf0] sm:$0xff]
    %v1667 = vld [vmem:[#allocation2 + $0xf8] sm:$0xff]
    %1668 = vmatprep.subr.mxu0 %v443
    %1669 = vmatpush1.msra.mxu0 %v442
    %1670 = vmatprep.subr.mxu0 %v439
    %1671 = vmatpush1.msra.mxu0 %v438
    %1672 = vmatprep.subr.mxu0 %v435
    %1673 = vmatpush1.msra.mxu0 %v434
    %1674 = vmatprep.subr.mxu0 %v431
    %1675 = vmatpush1.msra.mxu0 %v430
    %1676 = vmatprep.subr.mxu0 %v427
    %1677 = vmatpush1.msra.mxu0 %v426
    %1678 = vmatprep.subr.mxu0 %v423
    %1679 = vmatpush1.msra.mxu0 %v422
    %1680 = vmatprep.subr.mxu0 %v419
    %1681 = vmatpush1.msra.mxu0 %v418
    %1682 = vmatprep.subr.mxu0 %v415
    %1683 = vmatpush1.msra.mxu0 %v414
    %1684 = vmatprep.subr.mxu0 %v411
    %1685 = vmatpush1.msra.mxu0 %v410
    %1686 = vmatprep.subr.mxu0 %v407
    %1687 = vmatpush1.msra.mxu0 %v406
    %1688 = vmatprep.subr.mxu0 %v403
    %1689 = vmatpush1.msra.mxu0 %v402
    %1690 = vmatprep.subr.mxu0 %v399
    %1691 = vmatpush1.msra.mxu0 %v398
    %1692 = vmatprep.subr.mxu0 %v395
    %1693 = vmatpush1.msra.mxu0 %v394
    %1694 = vmatprep.subr.mxu0 %v391
    %1695 = vmatpush1.msra.mxu0 %v390
    %1696 = vmatprep.subr.mxu0 %v387
    %1697 = vmatpush1.msra.mxu0 %v386
    %1698 = vmatprep.subr.mxu0 %v383
    %1699 = vmatpush1.msra.mxu0 %v382
    %1700 = vmatprep.subr.mxu0 0.0
    %1701 = vmatpush2.msra.mxu0 0.0
    %1702 = vmatprep.subr.mxu0 0.0
    %1703 = vmatpush2.msra.mxu0 0.0
    %1704 = vmatprep.subr.mxu0 0.0
    %1705 = vmatpush2.msra.mxu0 0.0
    %1706 = vmatprep.subr.mxu0 0.0
    %1707 = vmatpush2.msra.mxu0 0.0
    %1708 = vmatprep.subr.mxu0 0.0
    %1709 = vmatpush2.msra.mxu0 0.0
    %1710 = vmatprep.subr.mxu0 0.0
    %1711 = vmatpush2.msra.mxu0 0.0
    %1712 = vmatprep.subr.mxu0 0.0
    %1713 = vmatpush2.msra.mxu0 0.0
    %1714 = vmatprep.subr.mxu0 0.0
    %1715 = vmatpush2.msra.mxu0 0.0
    %1716 = vmatprep.subr.mxu0 0.0
    %1717 = vmatpush2.msra.mxu0 0.0
    %1718 = vmatprep.subr.mxu0 0.0
    %1719 = vmatpush2.msra.mxu0 0.0
    %1720 = vmatprep.subr.mxu0 0.0
    %1721 = vmatpush2.msra.mxu0 0.0
    %1722 = vmatprep.subr.mxu0 0.0
    %1723 = vmatpush2.msra.mxu0 0.0
    %1724 = vmatprep.subr.mxu0 0.0
    %1725 = vmatpush2.msra.mxu0 0.0
    %1726 = vmatprep.subr.mxu0 0.0
    %1727 = vmatpush2.msra.mxu0 0.0
    %1728 = vmatprep.subr.mxu0 0.0
    %1729 = vmatpush2.msra.mxu0 0.0
    %1730 = vmatprep.subr.mxu0 0.0
    %1731 = vmatpush2.msra.mxu0 0.0
    %1732 = vmatprep.mubr.f32.mxu0 0.0
    %1733 = vmatmul.mubr.f32.gmra.mxu0 %v1663
    %v1734 = vpop.f32.mrf.mxu0
    %v1735 = vadd.f32 0.0, %v1734
    %v1736 = vpop.f32.mrf.mxu0
    %v1737 = vadd.f32 0.0, %v1736
    %1738 = vdwg.mxu0
    %1739 = vmatprep.subr.mxu0 %v445
    %1740 = vmatpush1.msra.mxu0 %v444
    %1741 = vmatprep.subr.mxu0 %v441
    %1742 = vmatpush1.msra.mxu0 %v440
    %1743 = vmatprep.subr.mxu0 %v437
    %1744 = vmatpush1.msra.mxu0 %v436
    %1745 = vmatprep.subr.mxu0 %v433
    %1746 = vmatpush1.msra.mxu0 %v432
    %1747 = vmatprep.subr.mxu0 %v429
    %1748 = vmatpush1.msra.mxu0 %v428
    %1749 = vmatprep.subr.mxu0 %v425
    %1750 = vmatpush1.msra.mxu0 %v424
    %1751 = vmatprep.subr.mxu0 %v421
    %1752 = vmatpush1.msra.mxu0 %v420
    %1753 = vmatprep.subr.mxu0 %v417
    %1754 = vmatpush1.msra.mxu0 %v416
    %1755 = vmatprep.subr.mxu0 %v413
    %1756 = vmatpush1.msra.mxu0 %v412
    %1757 = vmatprep.subr.mxu0 %v409
    %1758 = vmatpush1.msra.mxu0 %v408
    %1759 = vmatprep.subr.mxu0 %v405
    %1760 = vmatpush1.msra.mxu0 %v404
    %1761 = vmatprep.subr.mxu0 %v401
    %1762 = vmatpush1.msra.mxu0 %v400
    %1763 = vmatprep.subr.mxu0 %v397
    %1764 = vmatpush1.msra.mxu0 %v396
    %1765 = vmatprep.subr.mxu0 %v393
    %1766 = vmatpush1.msra.mxu0 %v392
    %1767 = vmatprep.subr.mxu0 %v389
    %1768 = vmatpush1.msra.mxu0 %v388
    %1769 = vmatprep.subr.mxu0 %v385
    %1770 = vmatpush1.msra.mxu0 %v384
    %1771 = vmatprep.subr.mxu0 0.0
    %1772 = vmatpush2.msra.mxu0 0.0
    %1773 = vmatprep.subr.mxu0 0.0
    %1774 = vmatpush2.msra.mxu0 0.0
    %1775 = vmatprep.subr.mxu0 0.0
    %1776 = vmatpush2.msra.mxu0 0.0
    %1777 = vmatprep.subr.mxu0 0.0
    %1778 = vmatpush2.msra.mxu0 0.0
    %1779 = vmatprep.subr.mxu0 0.0
    %1780 = vmatpush2.msra.mxu0 0.0
    %1781 = vmatprep.subr.mxu0 0.0
    %1782 = vmatpush2.msra.mxu0 0.0
    %1783 = vmatprep.subr.mxu0 0.0
    %1784 = vmatpush2.msra.mxu0 0.0
    %1785 = vmatprep.subr.mxu0 0.0
    %1786 = vmatpush2.msra.mxu0 0.0
    %1787 = vmatprep.subr.mxu0 0.0
    %1788 = vmatpush2.msra.mxu0 0.0
    %1789 = vmatprep.subr.mxu0 0.0
    %1790 = vmatpush2.msra.mxu0 0.0
    %1791 = vmatprep.subr.mxu0 0.0
    %1792 = vmatpush2.msra.mxu0 0.0
    %1793 = vmatprep.subr.mxu0 0.0
    %1794 = vmatpush2.msra.mxu0 0.0
    %1795 = vmatprep.subr.mxu0 0.0
    %1796 = vmatpush2.msra.mxu0 0.0
    %1797 = vmatprep.subr.mxu0 0.0
    %1798 = vmatpush2.msra.mxu0 0.0
    %1799 = vmatprep.subr.mxu0 0.0
    %1800 = vmatpush2.msra.mxu0 0.0
    %1801 = vmatprep.subr.mxu0 0.0
    %1802 = vmatpush2.msra.mxu0 0.0
    %1803 = vmatprep.mubr.f32.mxu0 0.0
    %1804 = vmatmul.mubr.f32.gmra.mxu0 %v1663
    %v1805 = vpop.f32.mrf.mxu0
    %v1806 = vadd.f32 0.0, %v1805
    %v1807 = vpop.f32.mrf.mxu0
    %v1808 = vadd.f32 0.0, %v1807
    %1809 = vdwg.mxu0
    %v1810 = vadd.f32 %v1664, %v1735
    %v1811 = vadd.f32 %v1665, %v1737
    %v1812 = vadd.f32 %v1666, %v1806
    %v1813 = vadd.f32 %v1667, %v1808
    %v1814 = vxor.u32 %v1810, 2147483648
    %v1815 = vxor.u32 %v1811, 2147483648
    %v1816 = vxor.u32 %v1812, 2147483648
    %v1817 = vmul.f32 %v1814, 1.442695
    %v1818 = vpow.pop %v1817
    %v1819 = vmul.f32 %v1815, 1.442695
    %v1820 = vpow.pop %v1819
    %v1821 = vmul.f32 %v1816, 1.442695
    %v1822 = vpow.pop %v1821
    %v1823 = vadd.f32 %v1818, 1.0
    %v1824 = vadd.f32 %v1820, 1.0
    %v1825 = vadd.f32 %v1822, 1.0
    %v1826 = vrcp.pop %v1823
    %v1827 = vmul.f32 1.0, %v1826
    %v1828 = vrcp.pop %v1824
    %v1829 = vmul.f32 1.0, %v1828
    %v1830 = vrcp.pop %v1825
    %v1831 = vmul.f32 1.0, %v1830
    %v1832 = vtanh.pop %v1813
    %v1833 = vmul.f32 %v1829, %v1661
    %v1834 = vmul.f32 %v1827, %v1832
    %v1835 = vadd.f32 %v1833, %v1834
    %v1836 = vtanh.pop %v1835
    %v1837 = vmul.f32 %v1831, %v1836
    %v1838 = vld [vmem:[#allocation6] sm:$0xff]
    %v1839 = vld [vmem:[#allocation6 + $0x8] sm:$0xff]
    %v1840 = vld [vmem:[#allocation6 + $0x10] sm:$0xff]
    %v1841 = vld [vmem:[#allocation6 + $0x18] sm:$0xff]
    %v1842 = vld [vmem:[#allocation6 + $0x20] sm:$0xff]
    %v1843 = vld [vmem:[#allocation6 + $0x28] sm:$0xff]
    %v1844 = vld [vmem:[#allocation6 + $0x30] sm:$0xff]
    %v1845 = vld [vmem:[#allocation6 + $0x38] sm:$0xff]
    %v1846 = vld [vmem:[#allocation6 + $0x40] sm:$0xff]
    %v1847 = vld [vmem:[#allocation6 + $0x48] sm:$0xff]
    %v1848 = vld [vmem:[#allocation6 + $0x50] sm:$0xff]
    %v1849 = vld [vmem:[#allocation6 + $0x58] sm:$0xff]
    %v1850 = vld [vmem:[#allocation6 + $0x60] sm:$0xff]
    %v1851 = vld [vmem:[#allocation6 + $0x68] sm:$0xff]
    %v1852 = vld [vmem:[#allocation6 + $0x70] sm:$0xff]
    %v1853 = vld [vmem:[#allocation6 + $0x78] sm:$0xff]
    %v1854 = vld [vmem:[%s5] sm:$0x1]
    %v1856 = vlaneseq
    %v1857 = vshrl.u32 %v1856, 7
    %v1858 = vsub.s32 0, %v1857
    %v1859 = vrot.slane %v1854, %v1858
    %1861 = vmatprep.subr.mxu0 0.0
    %1862 = vmatpush1.msra.mxu0 %v1853
    %1863 = vmatprep.subr.mxu0 0.0
    %1864 = vmatpush1.msra.mxu0 %v1852
    %1865 = vmatprep.subr.mxu0 0.0
    %1866 = vmatpush1.msra.mxu0 %v1851
    %1867 = vmatprep.subr.mxu0 0.0
    %1868 = vmatpush1.msra.mxu0 %v1850
    %1869 = vmatprep.subr.mxu0 0.0
    %1870 = vmatpush1.msra.mxu0 %v1849
    %1871 = vmatprep.subr.mxu0 0.0
    %1872 = vmatpush1.msra.mxu0 %v1848
    %1873 = vmatprep.subr.mxu0 0.0
    %1874 = vmatpush1.msra.mxu0 %v1847
    %1875 = vmatprep.subr.mxu0 0.0
    %1876 = vmatpush1.msra.mxu0 %v1846
    %1877 = vmatprep.subr.mxu0 0.0
    %1878 = vmatpush1.msra.mxu0 %v1845
    %1879 = vmatprep.subr.mxu0 0.0
    %1880 = vmatpush1.msra.mxu0 %v1844
    %1881 = vmatprep.subr.mxu0 0.0
    %1882 = vmatpush1.msra.mxu0 %v1843
    %1883 = vmatprep.subr.mxu0 0.0
    %1884 = vmatpush1.msra.mxu0 %v1842
    %1885 = vmatprep.subr.mxu0 0.0
    %1886 = vmatpush1.msra.mxu0 %v1841
    %1887 = vmatprep.subr.mxu0 0.0
    %1888 = vmatpush1.msra.mxu0 %v1840
    %1889 = vmatprep.subr.mxu0 0.0
    %1890 = vmatpush1.msra.mxu0 %v1839
    %1891 = vmatprep.subr.mxu0 0.0
    %1892 = vmatpush1.msra.mxu0 %v1838
    %1893 = vmatprep.subr.mxu0 0.0
    %1894 = vmatpush2.msra.mxu0 0.0
    %1895 = vmatprep.subr.mxu0 0.0
    %1896 = vmatpush2.msra.mxu0 0.0
    %1897 = vmatprep.subr.mxu0 0.0
    %1898 = vmatpush2.msra.mxu0 0.0
    %1899 = vmatprep.subr.mxu0 0.0
    %1900 = vmatpush2.msra.mxu0 0.0
    %1901 = vmatprep.subr.mxu0 0.0
    %1902 = vmatpush2.msra.mxu0 0.0
    %1903 = vmatprep.subr.mxu0 0.0
    %1904 = vmatpush2.msra.mxu0 0.0
    %1905 = vmatprep.subr.mxu0 0.0
    %1906 = vmatpush2.msra.mxu0 0.0
    %1907 = vmatprep.subr.mxu0 0.0
    %1908 = vmatpush2.msra.mxu0 0.0
    %1909 = vmatprep.subr.mxu0 0.0
    %1910 = vmatpush2.msra.mxu0 0.0
    %1911 = vmatprep.subr.mxu0 0.0
    %1912 = vmatpush2.msra.mxu0 0.0
    %1913 = vmatprep.subr.mxu0 0.0
    %1914 = vmatpush2.msra.mxu0 0.0
    %1915 = vmatprep.subr.mxu0 0.0
    %1916 = vmatpush2.msra.mxu0 0.0
    %1917 = vmatprep.subr.mxu0 0.0
    %1918 = vmatpush2.msra.mxu0 0.0
    %1919 = vmatprep.subr.mxu0 0.0
    %1920 = vmatpush2.msra.mxu0 0.0
    %1921 = vmatprep.subr.mxu0 0.0
    %1922 = vmatpush2.msra.mxu0 0.0
    %1923 = vmatprep.subr.mxu0 0.0
    %1924 = vmatpush2.msra.mxu0 0.0
    %1925 = vmatprep.mubr.f32.mxu0 0.0
    %1926 = vmatmul.mubr.f32.gmra.mxu0 %v619
    %v1927 = vpop.f32.mrf.mxu0
    %v1928 = vadd.f32 %v1859, %v1927
    %v1929 = vpop.f32.mrf.mxu0
    %1930 = vmatprep.mubr.f32.mxu0 0.0
    %1931 = vmatmul.mubr.f32.gmra.mxu0 %v793
    %v1932 = vpop.f32.mrf.mxu0
    %v1933 = vadd.f32 %v1859, %v1932
    %v1934 = vpop.f32.mrf.mxu0
    %1935 = vmatprep.mubr.f32.mxu0 0.0
    %1936 = vmatmul.mubr.f32.gmra.mxu0 %v967
    %v1937 = vpop.f32.mrf.mxu0
    %v1938 = vadd.f32 %v1859, %v1937
    %v1939 = vpop.f32.mrf.mxu0
    %1940 = vmatprep.mubr.f32.mxu0 0.0
    %1941 = vmatmul.mubr.f32.gmra.mxu0 %v1141
    %v1942 = vpop.f32.mrf.mxu0
    %v1943 = vadd.f32 %v1859, %v1942
    %v1944 = vpop.f32.mrf.mxu0
    %1945 = vmatprep.mubr.f32.mxu0 0.0
    %1946 = vmatmul.mubr.f32.gmra.mxu0 %v1315
    %v1947 = vpop.f32.mrf.mxu0
    %v1948 = vadd.f32 %v1859, %v1947
    %v1949 = vpop.f32.mrf.mxu0
    %1950 = vmatprep.mubr.f32.mxu0 0.0
    %1951 = vmatmul.mubr.f32.gmra.mxu0 %v1489
    %v1952 = vpop.f32.mrf.mxu0
    %v1953 = vadd.f32 %v1859, %v1952
    %v1954 = vpop.f32.mrf.mxu0
    %1955 = vmatprep.mubr.f32.mxu0 0.0
    %1956 = vmatmul.mubr.f32.gmra.mxu0 %v1663
    %v1957 = vpop.f32.mrf.mxu0
    %v1958 = vadd.f32 %v1859, %v1957
    %v1959 = vpop.f32.mrf.mxu0
    %1960 = vmatprep.mubr.f32.mxu0 0.0
    %1961 = vmatmul.mubr.f32.gmra.mxu0 %v1837
    %v1962 = vpop.f32.mrf.mxu0
    %v1963 = vadd.f32 %v1859, %v1962
    %v1964 = vpop.f32.mrf.mxu0
    %1965 = vdwg.mxu0
    %1966 = vst [vmem:[#allocation8] sm:$0xff] %v1928
    %1967 = vst [vmem:[#allocation8 + $0x8] sm:$0xff] %v1933
    %1968 = vst [vmem:[#allocation8 + $0x10] sm:$0xff] %v1938
    %1969 = vst [vmem:[#allocation8 + $0x18] sm:$0xff] %v1943
    %1970 = vst [vmem:[#allocation8 + $0x20] sm:$0xff] %v1948
    %1971 = vst [vmem:[#allocation8 + $0x28] sm:$0xff] %v1953
    %1972 = vst [vmem:[#allocation8 + $0x30] sm:$0xff] %v1958
    %1973 = vst [vmem:[#allocation8 + $0x38] sm:$0xff] %v1963
    // Predicated region
    $region34: #{tpu_custom_call.1} parent=1 // pred_check
      _
    $region35: #{tpu_custom_call.1} parent=1 // pred_check_branch
      %1975 = sbr.rel (0) target = $region37
    $region36: #{tpu_custom_call.1} parent=1 // pred_region
      %s1977 = ssub.s32 1024, 1024
      %1978 = vsyncadd [#allocation5], %s1977
      %s1979 = sshll.u32 [#allocation8], 4
      %s1980 = int_to_ptr.vmem [resolvable:$true] %s1979
      %1985 = dma.vmem_to_hbm [thread:$0]  %s1980, 1024, %s6, [#allocation5], 128, 128, 8
    $region37: #{tpu_custom_call.1} parent=1 // pred_fallthru
      _
    // Predicated region
    $region38: #{tpu_custom_call.1} parent=1 // pred_check
      _
    $region39: #{tpu_custom_call.1} parent=1 // pred_check_branch
      %1987 = sbr.rel (0) target = $region41
    $region40: #{tpu_custom_call.1} parent=1 // pred_region
      %1988 = dma.done [#allocation5], 1024
    $region41: #{tpu_custom_call.1} parent=1 // pred_fallthru
      _
    %1989 = vsyncpa [#allocation4], 1
    %1990 = vsyncpa [#allocation7], 1
    %1991 = vsyncpa [#allocation5], 1

</llo_original>
